<compile_context>
chip_gen: v7x
topology: tpu7x:2x2x1
jax: 0.10.0
libtpu: 0.0.40
codegen_flags: <defaults>
</compile_context>

<pallas_src>
import functools
import math

import jax
import jax.numpy as jnp
from jax.experimental import pallas as pl
from jax.experimental.pallas import tpu as pltpu

_NEG_INF = -1e30  # large finite negative: avoids NaN from fully-masked rows


def _flash_self_attention_kernel(v_ref, k_ref, q_ref, mask_ref, w_ref, b_ref,
                                 o_ref, m_sc, l_sc, acc_sc,
                                 *, heads, head_dim, inv_scale):
    """Grid = (N, q_tiles, k_tiles). Online softmax over the k axis."""
    ki = pl.program_id(2)
    nk = pl.num_programs(2)

    @pl.when(ki == 0)
    def _init():
        m_sc[...] = jnp.full_like(m_sc, _NEG_INF)
        l_sc[...] = jnp.zeros_like(l_sc)
        acc_sc[...] = jnp.zeros_like(acc_sc)

    q = q_ref[0]          # (tq, E), input dtype (bf16 or f32)
    k = k_ref[0]          # (tk, E)
    v = v_ref[0]          # (tk, E)

    # Additive mask bias, computed once per (q,k) tile and shared across heads.
    bias = jnp.where(mask_ref[0] == 0,
                     jnp.float32(_NEG_INF), jnp.float32(0.0))       # (tq, tk) f32

    # Static unrolled head loop; heads are contiguous E-slices so Q/K stay on lanes.
    for h in range(heads):
        lo = h * head_dim
        hi = lo + head_dim
        qh = q[:, lo:hi] * inv_scale                                # fold 1/sqrt(E) into q
        kh = k[:, lo:hi]
        vh = v[:, lo:hi]

        # scores (tq, tk): contract on head_dim, f32 accumulation, no explicit .T
        s = jax.lax.dot_general(qh, kh, (((1,), (1,)), ((), ())),
                                preferred_element_type=jnp.float32)
        s = s + bias

        m_prev = m_sc[h]                                            # (tq, 1)
        m_new = jnp.maximum(m_prev, jnp.max(s, axis=-1, keepdims=True))
        alpha = jnp.exp(m_prev - m_new)                             # (tq, 1)
        p = jnp.exp(s - m_new)                                      # (tq, tk) f32

        l_sc[h] = alpha * l_sc[h] + jnp.sum(p, axis=-1, keepdims=True)
        m_sc[h] = m_new
        acc_sc[:, lo:hi] = alpha * acc_sc[:, lo:hi] + jnp.dot(
            p.astype(v.dtype), vh, preferred_element_type=jnp.float32)

    @pl.when(ki == nk - 1)
    def _finalize():
        # Normalize each head's context slice (EUP reciprocal ~ free slot).
        for h in range(heads):
            lo = h * head_dim
            hi = lo + head_dim
            inv_l = pl.reciprocal(l_sc[h], approx=True)             # (tq, 1)
            acc_sc[:, lo:hi] = acc_sc[:, lo:hi] * inv_l
        # Output projection once per (batch, q-tile); W pre-transposed to (in, out).
        ctx = acc_sc[...].astype(w_ref.dtype)                       # (tq, E)
        out = jnp.dot(ctx, w_ref[...], preferred_element_type=jnp.float32)
        out = out + b_ref[...].astype(jnp.float32)                  # (1, E) broadcast
        o_ref[0] = out.astype(o_ref.dtype)


def _pick_tile(dim, cap, align):
    """Largest divisor of `dim` that is <= cap and a multiple of `align` (or == dim)."""
    cap = min(dim, cap)
    for t in range(cap, 0, -1):
        if dim % t == 0 and (t % align == 0 or t == dim):
            return t
    return dim


def self_attention_pallas(values, keys, query, mask, w_out, b_out,
                          *, embedding_size, heads, q_tile=256, k_tile=512):
    """values/keys: (N, K, E); query: (N, Q, E); mask: (N, Q, K); w_out: (E, E); b_out: (E,)."""
    head_dim = embedding_size // heads
    assert head_dim * heads == embedding_size
    N, Kl, E = keys.shape
    Ql = query.shape[1]
    assert values.shape == (N, Kl, E) and query.shape[2] == E
    assert mask.shape == (N, Ql, Kl)

    tq = _pick_tile(Ql, q_tile, 8)      # sublane-aligned q tile
    tk = _pick_tile(Kl, k_tile, 128)    # lane-aligned k tile

    # Pre-transpose the projection weight (no in-kernel .T); 2-D bias for a VMEM block.
    w_t = jnp.asarray(w_out).T                      # (in_features, out_features)
    b2d = jnp.asarray(b_out).reshape(1, E)

    # Rough VMEM budget: double-buffered blocks + resident weights + scratch, with headroom.
    in_b = jnp.dtype(query.dtype).itemsize
    est = 2 * (2 * tk * E * in_b                    # k, v
               + tq * E * in_b                      # q
               + tq * tk * mask.dtype.itemsize      # mask
               + tq * E * in_b)                     # out
    est += (E * E + E) * jnp.dtype(w_t.dtype).itemsize
    est += tq * E * 4 + 2 * heads * tq * 128 * 4    # f32 acc + padded m/l scratch
    vmem_limit = min(100 * 2**20, max(32 * 2**20, int(est * 2)))

    kernel = functools.partial(_flash_self_attention_kernel,
                               heads=heads, head_dim=head_dim,
                               inv_scale=1.0 / math.sqrt(embedding_size))

    return pl.pallas_call(
        kernel,
        out_shape=jax.ShapeDtypeStruct((N, Ql, E), query.dtype),
        grid_spec=pltpu.PrefetchScalarGridSpec(
            num_scalar_prefetch=0,
            grid=(N, Ql // tq, Kl // tk),
            in_specs=[
                pl.BlockSpec((1, tk, E), lambda n, qi, ki: (n, ki, 0)),     # values
                pl.BlockSpec((1, tk, E), lambda n, qi, ki: (n, ki, 0)),     # keys
                pl.BlockSpec((1, tq, E), lambda n, qi, ki: (n, qi, 0)),     # query
                pl.BlockSpec((1, tq, tk), lambda n, qi, ki: (n, qi, ki)),   # mask
                pl.BlockSpec((E, E), lambda n, qi, ki: (0, 0)),             # W_out^T (resident)
                pl.BlockSpec((1, E), lambda n, qi, ki: (0, 0)),             # bias  (resident)
            ],
            out_specs=pl.BlockSpec((1, tq, E), lambda n, qi, ki: (n, qi, 0)),
            scratch_shapes=[
                pltpu.VMEM((heads, tq, 1), jnp.float32),   # running max, per head
                pltpu.VMEM((heads, tq, 1), jnp.float32),   # running sum, per head
                pltpu.VMEM((tq, E), jnp.float32),          # context accumulator (heads along E)
            ],
        ),
        compiler_params=pltpu.CompilerParams(
            dimension_semantics=("parallel", "parallel", "arbitrary"),
            vmem_limit_bytes=vmem_limit,
        ),
    )(values, keys, query, mask, w_t, b2d)


def self_attention_ref(values, keys, query, mask, w_out, b_out,
                       *, embedding_size, heads):
    """Pure-JAX reference mirroring the PyTorch forward exactly."""
    head_dim = embedding_size // heads
    N, Kl, _ = keys.shape
    Ql = query.shape[1]
    v = values.reshape(N, Kl, heads, head_dim).astype(jnp.float32)
    k = keys.reshape(N, Kl, heads, head_dim).astype(jnp.float32)
    q = query.reshape(N, Ql, heads, head_dim).astype(jnp.float32)
    energy = jnp.einsum('nqhd,nkhd->nhqk', q, k)
    energy = jnp.where(mask[:, None, :, :] == 0, -jnp.inf, energy)
    att = jax.nn.softmax(energy / embedding_size ** 0.5, axis=3)
    out = jnp.einsum('nhqk,nkhd->nqhd', att, v).reshape(N, Ql, heads * head_dim)
    return out @ w_out.T.astype(jnp.float32) + b_out.astype(jnp.float32)


if __name__ == "__main__":
    # Small deterministic setup: batch=2, seq=8, embedding=32, heads=4.
    N, S, E, H = 2, 8, 32, 4
    key = jax.random.PRNGKey(0)
    k1, k2, k3, k4, k5 = jax.random.split(key, 5)

    values = jax.random.normal(k1, (N, S, E), dtype=jnp.float32)
    keys_ = jax.random.normal(k2, (N, S, E), dtype=jnp.float32)
    query = jax.random.normal(k3, (N, S, E), dtype=jnp.float32)

    # Causal mask (1 = keep, 0 = masked-out), broadcast over heads.
    mask = jnp.tril(jnp.ones((S, S), dtype=jnp.int32))[None].repeat(N, axis=0)

    # fulcon_out = nn.Linear(E, E): weight (E, E), bias (E,) — deterministic init.
    bound = 1.0 / (E ** 0.5)
    w_out = jax.random.uniform(k4, (E, E), jnp.float32, -bound, bound)
    b_out = jax.random.uniform(k5, (E,), jnp.float32, -bound, bound)

    out = self_attention_pallas(values, keys_, query, mask, w_out, b_out,
                                embedding_size=E, heads=H)
    out = jax.block_until_ready(out)

    ref = self_attention_ref(values, keys_, query, mask, w_out, b_out,
                             embedding_size=E, heads=H)
    assert out.shape == (N, S, E)
    # Tolerance accounts for the approximate (EUP) reciprocal in the softmax normalize.
    assert jnp.allclose(out, ref, atol=2e-2, rtol=2e-2), "mismatch vs reference"

    print("KERNEL_OK")
</pallas_src>

<mosaic_0001>
module attributes {stable_mosaic.version = 11 : i64} {
  func.func @_flash_self_attention_kernel(%arg0: i32, %arg1: i32, %arg2: i32, %arg3: memref<1x8x32xf32, #tpu.memory_space<vmem>>, %arg4: memref<1x8x32xf32, #tpu.memory_space<vmem>>, %arg5: memref<1x8x32xf32, #tpu.memory_space<vmem>>, %arg6: memref<1x8x8xi32, #tpu.memory_space<vmem>>, %arg7: memref<32x32xf32, #tpu.memory_space<vmem>>, %arg8: memref<1x32xf32, #tpu.memory_space<vmem>>, %arg9: memref<1x8x32xf32, #tpu.memory_space<vmem>>, %arg10: memref<4x8x1xf32, #tpu.memory_space<vmem>>, %arg11: memref<4x8x1xf32, #tpu.memory_space<vmem>>, %arg12: memref<8x32xf32, #tpu.memory_space<vmem>>) attributes {dimension_semantics = [#tpu.dimension_semantics<parallel>, #tpu.dimension_semantics<parallel>, #tpu.dimension_semantics<arbitrary>], iteration_bounds = array<i64: 2, 1, 1>, scalar_prefetch = 0 : i64, scratch_operands = 3 : i64, tpu.core_type = #tpu.core_type<tc>, window_params = [{transform_indices = @transform_0, window_bounds = array<i64: 1, 8, 32>}, {transform_indices = @transform_1, window_bounds = array<i64: 1, 8, 32>}, {transform_indices = @transform_2, window_bounds = array<i64: 1, 8, 32>}, {transform_indices = @transform_3, window_bounds = array<i64: 1, 8, 8>}, {pipeline_mode = #tpu.pipeline_mode<synchronous>, transform_indices = @transform_4, window_bounds = array<i64: 32, 32>}, {pipeline_mode = #tpu.pipeline_mode<synchronous>, transform_indices = @transform_5, window_bounds = array<i64: 1, 32>}, {transform_indices = @transform_6, window_bounds = array<i64: 1, 8, 32>}]} {
    %c0_i32 = arith.constant 0 : i32
    %0 = arith.cmpi eq, %arg2, %c0_i32 : i32
    %1 = arith.extui %0 : i1 to i32
    %c0_i32_0 = arith.constant 0 : i32
    %2 = arith.cmpi ne, %1, %c0_i32_0 : i32
    scf.if %2 {
      %cst_94 = arith.constant -1.000000e+30 : f32
      %159 = vector.broadcast %cst_94 : f32 to vector<4x8x1xf32>
      %c0_95 = arith.constant 0 : index
      %c0_96 = arith.constant 0 : index
      %c0_97 = arith.constant 0 : index
      %160 = vector.load %arg10[%c0_95, %c0_96, %c0_97] : memref<4x8x1xf32, #tpu.memory_space<vmem>>, vector<4x8x1xf32>
      tpu.vector_store %arg10[%c0_95, %c0_96, %c0_97], %159 {strides = array<i32>} : memref<4x8x1xf32, #tpu.memory_space<vmem>>, vector<4x8x1xf32>,
      %cst_98 = arith.constant 0.000000e+00 : f32
      %161 = vector.broadcast %cst_98 : f32 to vector<4x8x1xf32>
      %c0_99 = arith.constant 0 : index
      %c0_100 = arith.constant 0 : index
      %c0_101 = arith.constant 0 : index
      %162 = vector.load %arg11[%c0_99, %c0_100, %c0_101] : memref<4x8x1xf32, #tpu.memory_space<vmem>>, vector<4x8x1xf32>
      tpu.vector_store %arg11[%c0_99, %c0_100, %c0_101], %161 {strides = array<i32>} : memref<4x8x1xf32, #tpu.memory_space<vmem>>, vector<4x8x1xf32>,
      %cst_102 = arith.constant 0.000000e+00 : f32
      %163 = vector.broadcast %cst_102 : f32 to vector<8x32xf32>
      %c0_103 = arith.constant 0 : index
      %c0_104 = arith.constant 0 : index
      %164 = vector.load %arg12[%c0_103, %c0_104] : memref<8x32xf32, #tpu.memory_space<vmem>>, vector<8x32xf32>
      tpu.vector_store %arg12[%c0_103, %c0_104], %163 {strides = array<i32>} : memref<8x32xf32, #tpu.memory_space<vmem>>, vector<8x32xf32>,
    } else {
    }
    %c0 = arith.constant 0 : index
    %c0_1 = arith.constant 0 : index
    %c0_2 = arith.constant 0 : index
    %3 = vector.load %arg5[%c0, %c0_1, %c0_2] : memref<1x8x32xf32, #tpu.memory_space<vmem>>, vector<1x8x32xf32>
    %4 = vector.shape_cast %3 : vector<1x8x32xf32> to vector<8x32xf32>
    %c0_3 = arith.constant 0 : index
    %c0_4 = arith.constant 0 : index
    %c0_5 = arith.constant 0 : index
    %5 = vector.load %arg4[%c0_3, %c0_4, %c0_5] : memref<1x8x32xf32, #tpu.memory_space<vmem>>, vector<1x8x32xf32>
    %6 = vector.shape_cast %5 : vector<1x8x32xf32> to vector<8x32xf32>
    %c0_6 = arith.constant 0 : index
    %c0_7 = arith.constant 0 : index
    %c0_8 = arith.constant 0 : index
    %7 = vector.load %arg3[%c0_6, %c0_7, %c0_8] : memref<1x8x32xf32, #tpu.memory_space<vmem>>, vector<1x8x32xf32>
    %8 = vector.shape_cast %7 : vector<1x8x32xf32> to vector<8x32xf32>
    %c0_9 = arith.constant 0 : index
    %c0_10 = arith.constant 0 : index
    %c0_11 = arith.constant 0 : index
    %9 = vector.load %arg6[%c0_9, %c0_10, %c0_11] : memref<1x8x8xi32, #tpu.memory_space<vmem>>, vector<1x8x8xi32>
    %10 = vector.shape_cast %9 : vector<1x8x8xi32> to vector<8x8xi32>
    %c0_i32_12 = arith.constant 0 : i32
    %11 = vector.broadcast %c0_i32_12 : i32 to vector<8x8xi32>
    %12 = arith.cmpi eq, %10, %11 : vector<8x8xi32>
    %cst = arith.constant -1.000000e+30 : f32
    %cst_13 = arith.constant 0.000000e+00 : f32
    %13 = vector.broadcast %cst : f32 to vector<8x8xf32>
    %14 = vector.broadcast %cst_13 : f32 to vector<8x8xf32>
    %15 = arith.select %12, %13, %14 : vector<8x8xi1>, vector<8x8xf32>
    %16 = vector.extract_strided_slice %4 {offsets = [0, 0], sizes = [8, 8], strides = [1, 1]} : vector<8x32xf32> to vector<8x8xf32>
    %cst_14 = arith.constant 0.176776692 : f32
    %17 = vector.broadcast %cst_14 : f32 to vector<8x8xf32>
    %18 = arith.mulf %16, %17 : vector<8x8xf32>
    %19 = vector.extract_strided_slice %6 {offsets = [0, 0], sizes = [8, 8], strides = [1, 1]} : vector<8x32xf32> to vector<8x8xf32>
    %20 = vector.extract_strided_slice %8 {offsets = [0, 0], sizes = [8, 8], strides = [1, 1]} : vector<8x32xf32> to vector<8x8xf32>
    %cst_15 = arith.constant dense<0.000000e+00> : vector<8x8xf32>
    %21 = tpu.matmul %18, %19, %cst_15 {dimension_numbers = #tpu.dot_dimension_numbers<[1], [1], [0], [0], [0, 0, 1, 0], [], []>} : vector<8x8xf32>, vector<8x8xf32>, vector<8x8xf32> -> vector<8x8xf32>
    %22 = arith.addf %21, %15 : vector<8x8xf32>
    %c0_16 = arith.constant 0 : index
    %c0_17 = arith.constant 0 : index
    %c0_18 = arith.constant 0 : index
    %23 = vector.load %arg10[%c0_16, %c0_17, %c0_18] : memref<4x8x1xf32, #tpu.memory_space<vmem>>, vector<1x8x1xf32>
    %24 = vector.shape_cast %23 : vector<1x8x1xf32> to vector<8x1xf32>
    %cst_19 = arith.constant dense<0xFF800000> : vector<8xf32>
    %25 = vector.multi_reduction <maximumf>, %22, %cst_19 [1] : vector<8x8xf32> to vector<8xf32>
    %26 = vector.shape_cast %25 : vector<8xf32> to vector<8x1xf32>
    %27 = arith.maximumf %24, %26 : vector<8x1xf32>
    %28 = arith.subf %24, %27 : vector<8x1xf32>
    %29 = math.exp %28 : vector<8x1xf32>
    %30 = vector.broadcast %27 : vector<8x1xf32> to vector<8x8xf32>
    %31 = arith.subf %22, %30 : vector<8x8xf32>
    %32 = math.exp %31 : vector<8x8xf32>
    %c0_20 = arith.constant 0 : index
    %c0_21 = arith.constant 0 : index
    %c0_22 = arith.constant 0 : index
    %33 = vector.load %arg11[%c0_20, %c0_21, %c0_22] : memref<4x8x1xf32, #tpu.memory_space<vmem>>, vector<1x8x1xf32>
    %34 = vector.shape_cast %33 : vector<1x8x1xf32> to vector<8x1xf32>
    %35 = arith.mulf %29, %34 : vector<8x1xf32>
    %cst_23 = arith.constant dense<0.000000e+00> : vector<8xf32>
    %36 = vector.multi_reduction <add>, %32, %cst_23 [1] : vector<8x8xf32> to vector<8xf32>
    %37 = vector.shape_cast %36 : vector<8xf32> to vector<8x1xf32>
    %38 = arith.addf %35, %37 : vector<8x1xf32>
    %c0_24 = arith.constant 0 : index
    %c0_25 = arith.constant 0 : index
    %c0_26 = arith.constant 0 : index
    %39 = vector.load %arg11[%c0_24, %c0_25, %c0_26] : memref<4x8x1xf32, #tpu.memory_space<vmem>>, vector<1x8x1xf32>
    %40 = vector.shape_cast %39 : vector<1x8x1xf32> to vector<8x1xf32>
    %41 = vector.shape_cast %38 : vector<8x1xf32> to vector<1x8x1xf32>
    tpu.vector_store %arg11[%c0_24, %c0_25, %c0_26], %41 {strides = array<i32>} : memref<4x8x1xf32, #tpu.memory_space<vmem>>, vector<1x8x1xf32>,
    %c0_27 = arith.constant 0 : index
    %c0_28 = arith.constant 0 : index
    %c0_29 = arith.constant 0 : index
    %42 = vector.load %arg10[%c0_27, %c0_28, %c0_29] : memref<4x8x1xf32, #tpu.memory_space<vmem>>, vector<1x8x1xf32>
    %43 = vector.shape_cast %42 : vector<1x8x1xf32> to vector<8x1xf32>
    %44 = vector.shape_cast %27 : vector<8x1xf32> to vector<1x8x1xf32>
    tpu.vector_store %arg10[%c0_27, %c0_28, %c0_29], %44 {strides = array<i32>} : memref<4x8x1xf32, #tpu.memory_space<vmem>>, vector<1x8x1xf32>,
    %c0_30 = arith.constant 0 : index
    %c0_31 = arith.constant 0 : index
    %45 = vector.load %arg12[%c0_30, %c0_31] : memref<8x32xf32, #tpu.memory_space<vmem>>, vector<8x8xf32>
    %46 = vector.broadcast %29 : vector<8x1xf32> to vector<8x8xf32>
    %47 = arith.mulf %46, %45 : vector<8x8xf32>
    %cst_32 = arith.constant dense<0.000000e+00> : vector<8x8xf32>
    %48 = tpu.matmul %32, %20, %cst_32 {dimension_numbers = #tpu.dot_dimension_numbers<[1], [0], [0], [1], [0, 0, 1, 1], [], []>} : vector<8x8xf32>, vector<8x8xf32>, vector<8x8xf32> -> vector<8x8xf32>
    %49 = arith.addf %47, %48 : vector<8x8xf32>
    %c0_33 = arith.constant 0 : index
    %c0_34 = arith.constant 0 : index
    %50 = vector.load %arg12[%c0_33, %c0_34] : memref<8x32xf32, #tpu.memory_space<vmem>>, vector<8x8xf32>
    tpu.vector_store %arg12[%c0_33, %c0_34], %49 {strides = array<i32>} : memref<8x32xf32, #tpu.memory_space<vmem>>, vector<8x8xf32>,
    %51 = vector.extract_strided_slice %4 {offsets = [0, 8], sizes = [8, 8], strides = [1, 1]} : vector<8x32xf32> to vector<8x8xf32>
    %cst_35 = arith.constant 0.176776692 : f32
    %52 = vector.broadcast %cst_35 : f32 to vector<8x8xf32>
    %53 = arith.mulf %51, %52 : vector<8x8xf32>
    %54 = vector.extract_strided_slice %6 {offsets = [0, 8], sizes = [8, 8], strides = [1, 1]} : vector<8x32xf32> to vector<8x8xf32>
    %55 = vector.extract_strided_slice %8 {offsets = [0, 8], sizes = [8, 8], strides = [1, 1]} : vector<8x32xf32> to vector<8x8xf32>
    %cst_36 = arith.constant dense<0.000000e+00> : vector<8x8xf32>
    %56 = tpu.matmul %53, %54, %cst_36 {dimension_numbers = #tpu.dot_dimension_numbers<[1], [1], [0], [0], [0, 0, 1, 0], [], []>} : vector<8x8xf32>, vector<8x8xf32>, vector<8x8xf32> -> vector<8x8xf32>
    %57 = arith.addf %56, %15 : vector<8x8xf32>
    %c1 = arith.constant 1 : index
    %c0_37 = arith.constant 0 : index
    %c0_38 = arith.constant 0 : index
    %58 = vector.load %arg10[%c1, %c0_37, %c0_38] : memref<4x8x1xf32, #tpu.memory_space<vmem>>, vector<1x8x1xf32>
    %59 = vector.shape_cast %58 : vector<1x8x1xf32> to vector<8x1xf32>
    %cst_39 = arith.constant dense<0xFF800000> : vector<8xf32>
    %60 = vector.multi_reduction <maximumf>, %57, %cst_39 [1] : vector<8x8xf32> to vector<8xf32>
    %61 = vector.shape_cast %60 : vector<8xf32> to vector<8x1xf32>
    %62 = arith.maximumf %59, %61 : vector<8x1xf32>
    %63 = arith.subf %59, %62 : vector<8x1xf32>
    %64 = math.exp %63 : vector<8x1xf32>
    %65 = vector.broadcast %62 : vector<8x1xf32> to vector<8x8xf32>
    %66 = arith.subf %57, %65 : vector<8x8xf32>
    %67 = math.exp %66 : vector<8x8xf32>
    %c1_40 = arith.constant 1 : index
    %c0_41 = arith.constant 0 : index
    %c0_42 = arith.constant 0 : index
    %68 = vector.load %arg11[%c1_40, %c0_41, %c0_42] : memref<4x8x1xf32, #tpu.memory_space<vmem>>, vector<1x8x1xf32>
    %69 = vector.shape_cast %68 : vector<1x8x1xf32> to vector<8x1xf32>
    %70 = arith.mulf %64, %69 : vector<8x1xf32>
    %cst_43 = arith.constant dense<0.000000e+00> : vector<8xf32>
    %71 = vector.multi_reduction <add>, %67, %cst_43 [1] : vector<8x8xf32> to vector<8xf32>
    %72 = vector.shape_cast %71 : vector<8xf32> to vector<8x1xf32>
    %73 = arith.addf %70, %72 : vector<8x1xf32>
    %c1_44 = arith.constant 1 : index
    %c0_45 = arith.constant 0 : index
    %c0_46 = arith.constant 0 : index
    %74 = vector.load %arg11[%c1_44, %c0_45, %c0_46] : memref<4x8x1xf32, #tpu.memory_space<vmem>>, vector<1x8x1xf32>
    %75 = vector.shape_cast %74 : vector<1x8x1xf32> to vector<8x1xf32>
    %76 = vector.shape_cast %73 : vector<8x1xf32> to vector<1x8x1xf32>
    tpu.vector_store %arg11[%c1_44, %c0_45, %c0_46], %76 {strides = array<i32>} : memref<4x8x1xf32, #tpu.memory_space<vmem>>, vector<1x8x1xf32>,
    %c1_47 = arith.constant 1 : index
    %c0_48 = arith.constant 0 : index
    %c0_49 = arith.constant 0 : index
    %77 = vector.load %arg10[%c1_47, %c0_48, %c0_49] : memref<4x8x1xf32, #tpu.memory_space<vmem>>, vector<1x8x1xf32>
    %78 = vector.shape_cast %77 : vector<1x8x1xf32> to vector<8x1xf32>
    %79 = vector.shape_cast %62 : vector<8x1xf32> to vector<1x8x1xf32>
    tpu.vector_store %arg10[%c1_47, %c0_48, %c0_49], %79 {strides = array<i32>} : memref<4x8x1xf32, #tpu.memory_space<vmem>>, vector<1x8x1xf32>,
    %c0_50 = arith.constant 0 : index
    %c8 = arith.constant 8 : index
    %80 = vector.load %arg12[%c0_50, %c8] : memref<8x32xf32, #tpu.memory_space<vmem>>, vector<8x8xf32>
    %81 = vector.broadcast %64 : vector<8x1xf32> to vector<8x8xf32>
    %82 = arith.mulf %81, %80 : vector<8x8xf32>
    %cst_51 = arith.constant dense<0.000000e+00> : vector<8x8xf32>
    %83 = tpu.matmul %67, %55, %cst_51 {dimension_numbers = #tpu.dot_dimension_numbers<[1], [0], [0], [1], [0, 0, 1, 1], [], []>} : vector<8x8xf32>, vector<8x8xf32>, vector<8x8xf32> -> vector<8x8xf32>
    %84 = arith.addf %82, %83 : vector<8x8xf32>
    %c0_52 = arith.constant 0 : index
    %c8_53 = arith.constant 8 : index
    %85 = vector.load %arg12[%c0_52, %c8_53] : memref<8x32xf32, #tpu.memory_space<vmem>>, vector<8x8xf32>
    tpu.vector_store %arg12[%c0_52, %c8_53], %84 {strides = array<i32>} : memref<8x32xf32, #tpu.memory_space<vmem>>, vector<8x8xf32>,
    %86 = vector.extract_strided_slice %4 {offsets = [0, 16], sizes = [8, 8], strides = [1, 1]} : vector<8x32xf32> to vector<8x8xf32>
    %cst_54 = arith.constant 0.176776692 : f32
    %87 = vector.broadcast %cst_54 : f32 to vector<8x8xf32>
    %88 = arith.mulf %86, %87 : vector<8x8xf32>
    %89 = vector.extract_strided_slice %6 {offsets = [0, 16], sizes = [8, 8], strides = [1, 1]} : vector<8x32xf32> to vector<8x8xf32>
    %90 = vector.extract_strided_slice %8 {offsets = [0, 16], sizes = [8, 8], strides = [1, 1]} : vector<8x32xf32> to vector<8x8xf32>
    %cst_55 = arith.constant dense<0.000000e+00> : vector<8x8xf32>
    %91 = tpu.matmul %88, %89, %cst_55 {dimension_numbers = #tpu.dot_dimension_numbers<[1], [1], [0], [0], [0, 0, 1, 0], [], []>} : vector<8x8xf32>, vector<8x8xf32>, vector<8x8xf32> -> vector<8x8xf32>
    %92 = arith.addf %91, %15 : vector<8x8xf32>
    %c2 = arith.constant 2 : index
    %c0_56 = arith.constant 0 : index
    %c0_57 = arith.constant 0 : index
    %93 = vector.load %arg10[%c2, %c0_56, %c0_57] : memref<4x8x1xf32, #tpu.memory_space<vmem>>, vector<1x8x1xf32>
    %94 = vector.shape_cast %93 : vector<1x8x1xf32> to vector<8x1xf32>
    %cst_58 = arith.constant dense<0xFF800000> : vector<8xf32>
    %95 = vector.multi_reduction <maximumf>, %92, %cst_58 [1] : vector<8x8xf32> to vector<8xf32>
    %96 = vector.shape_cast %95 : vector<8xf32> to vector<8x1xf32>
    %97 = arith.maximumf %94, %96 : vector<8x1xf32>
    %98 = arith.subf %94, %97 : vector<8x1xf32>
    %99 = math.exp %98 : vector<8x1xf32>
    %100 = vector.broadcast %97 : vector<8x1xf32> to vector<8x8xf32>
    %101 = arith.subf %92, %100 : vector<8x8xf32>
    %102 = math.exp %101 : vector<8x8xf32>
    %c2_59 = arith.constant 2 : index
    %c0_60 = arith.constant 0 : index
    %c0_61 = arith.constant 0 : index
    %103 = vector.load %arg11[%c2_59, %c0_60, %c0_61] : memref<4x8x1xf32, #tpu.memory_space<vmem>>, vector<1x8x1xf32>
    %104 = vector.shape_cast %103 : vector<1x8x1xf32> to vector<8x1xf32>
    %105 = arith.mulf %99, %104 : vector<8x1xf32>
    %cst_62 = arith.constant dense<0.000000e+00> : vector<8xf32>
    %106 = vector.multi_reduction <add>, %102, %cst_62 [1] : vector<8x8xf32> to vector<8xf32>
    %107 = vector.shape_cast %106 : vector<8xf32> to vector<8x1xf32>
    %108 = arith.addf %105, %107 : vector<8x1xf32>
    %c2_63 = arith.constant 2 : index
    %c0_64 = arith.constant 0 : index
    %c0_65 = arith.constant 0 : index
    %109 = vector.load %arg11[%c2_63, %c0_64, %c0_65] : memref<4x8x1xf32, #tpu.memory_space<vmem>>, vector<1x8x1xf32>
    %110 = vector.shape_cast %109 : vector<1x8x1xf32> to vector<8x1xf32>
    %111 = vector.shape_cast %108 : vector<8x1xf32> to vector<1x8x1xf32>
    tpu.vector_store %arg11[%c2_63, %c0_64, %c0_65], %111 {strides = array<i32>} : memref<4x8x1xf32, #tpu.memory_space<vmem>>, vector<1x8x1xf32>,
    %c2_66 = arith.constant 2 : index
    %c0_67 = arith.constant 0 : index
    %c0_68 = arith.constant 0 : index
    %112 = vector.load %arg10[%c2_66, %c0_67, %c0_68] : memref<4x8x1xf32, #tpu.memory_space<vmem>>, vector<1x8x1xf32>
    %113 = vector.shape_cast %112 : vector<1x8x1xf32> to vector<8x1xf32>
    %114 = vector.shape_cast %97 : vector<8x1xf32> to vector<1x8x1xf32>
    tpu.vector_store %arg10[%c2_66, %c0_67, %c0_68], %114 {strides = array<i32>} : memref<4x8x1xf32, #tpu.memory_space<vmem>>, vector<1x8x1xf32>,
    %c0_69 = arith.constant 0 : index
    %c16 = arith.constant 16 : index
    %115 = vector.load %arg12[%c0_69, %c16] : memref<8x32xf32, #tpu.memory_space<vmem>>, vector<8x8xf32>
    %116 = vector.broadcast %99 : vector<8x1xf32> to vector<8x8xf32>
    %117 = arith.mulf %116, %115 : vector<8x8xf32>
    %cst_70 = arith.constant dense<0.000000e+00> : vector<8x8xf32>
    %118 = tpu.matmul %102, %90, %cst_70 {dimension_numbers = #tpu.dot_dimension_numbers<[1], [0], [0], [1], [0, 0, 1, 1], [], []>} : vector<8x8xf32>, vector<8x8xf32>, vector<8x8xf32> -> vector<8x8xf32>
    %119 = arith.addf %117, %118 : vector<8x8xf32>
    %c0_71 = arith.constant 0 : index
    %c16_72 = arith.constant 16 : index
    %120 = vector.load %arg12[%c0_71, %c16_72] : memref<8x32xf32, #tpu.memory_space<vmem>>, vector<8x8xf32>
    tpu.vector_store %arg12[%c0_71, %c16_72], %119 {strides = array<i32>} : memref<8x32xf32, #tpu.memory_space<vmem>>, vector<8x8xf32>,
    %121 = vector.extract_strided_slice %4 {offsets = [0, 24], sizes = [8, 8], strides = [1, 1]} : vector<8x32xf32> to vector<8x8xf32>
    %cst_73 = arith.constant 0.176776692 : f32
    %122 = vector.broadcast %cst_73 : f32 to vector<8x8xf32>
    %123 = arith.mulf %121, %122 : vector<8x8xf32>
    %124 = vector.extract_strided_slice %6 {offsets = [0, 24], sizes = [8, 8], strides = [1, 1]} : vector<8x32xf32> to vector<8x8xf32>
    %125 = vector.extract_strided_slice %8 {offsets = [0, 24], sizes = [8, 8], strides = [1, 1]} : vector<8x32xf32> to vector<8x8xf32>
    %cst_74 = arith.constant dense<0.000000e+00> : vector<8x8xf32>
    %126 = tpu.matmul %123, %124, %cst_74 {dimension_numbers = #tpu.dot_dimension_numbers<[1], [1], [0], [0], [0, 0, 1, 0], [], []>} : vector<8x8xf32>, vector<8x8xf32>, vector<8x8xf32> -> vector<8x8xf32>
    %127 = arith.addf %126, %15 : vector<8x8xf32>
    %c3 = arith.constant 3 : index
    %c0_75 = arith.constant 0 : index
    %c0_76 = arith.constant 0 : index
    %128 = vector.load %arg10[%c3, %c0_75, %c0_76] : memref<4x8x1xf32, #tpu.memory_space<vmem>>, vector<1x8x1xf32>
    %129 = vector.shape_cast %128 : vector<1x8x1xf32> to vector<8x1xf32>
    %cst_77 = arith.constant dense<0xFF800000> : vector<8xf32>
    %130 = vector.multi_reduction <maximumf>, %127, %cst_77 [1] : vector<8x8xf32> to vector<8xf32>
    %131 = vector.shape_cast %130 : vector<8xf32> to vector<8x1xf32>
    %132 = arith.maximumf %129, %131 : vector<8x1xf32>
    %133 = arith.subf %129, %132 : vector<8x1xf32>
    %134 = math.exp %133 : vector<8x1xf32>
    %135 = vector.broadcast %132 : vector<8x1xf32> to vector<8x8xf32>
    %136 = arith.subf %127, %135 : vector<8x8xf32>
    %137 = math.exp %136 : vector<8x8xf32>
    %c3_78 = arith.constant 3 : index
    %c0_79 = arith.constant 0 : index
    %c0_80 = arith.constant 0 : index
    %138 = vector.load %arg11[%c3_78, %c0_79, %c0_80] : memref<4x8x1xf32, #tpu.memory_space<vmem>>, vector<1x8x1xf32>
    %139 = vector.shape_cast %138 : vector<1x8x1xf32> to vector<8x1xf32>
    %140 = arith.mulf %134, %139 : vector<8x1xf32>
    %cst_81 = arith.constant dense<0.000000e+00> : vector<8xf32>
    %141 = vector.multi_reduction <add>, %137, %cst_81 [1] : vector<8x8xf32> to vector<8xf32>
    %142 = vector.shape_cast %141 : vector<8xf32> to vector<8x1xf32>
    %143 = arith.addf %140, %142 : vector<8x1xf32>
    %c3_82 = arith.constant 3 : index
    %c0_83 = arith.constant 0 : index
    %c0_84 = arith.constant 0 : index
    %144 = vector.load %arg11[%c3_82, %c0_83, %c0_84] : memref<4x8x1xf32, #tpu.memory_space<vmem>>, vector<1x8x1xf32>
    %145 = vector.shape_cast %144 : vector<1x8x1xf32> to vector<8x1xf32>
    %146 = vector.shape_cast %143 : vector<8x1xf32> to vector<1x8x1xf32>
    tpu.vector_store %arg11[%c3_82, %c0_83, %c0_84], %146 {strides = array<i32>} : memref<4x8x1xf32, #tpu.memory_space<vmem>>, vector<1x8x1xf32>,
    %c3_85 = arith.constant 3 : index
    %c0_86 = arith.constant 0 : index
    %c0_87 = arith.constant 0 : index
    %147 = vector.load %arg10[%c3_85, %c0_86, %c0_87] : memref<4x8x1xf32, #tpu.memory_space<vmem>>, vector<1x8x1xf32>
    %148 = vector.shape_cast %147 : vector<1x8x1xf32> to vector<8x1xf32>
    %149 = vector.shape_cast %132 : vector<8x1xf32> to vector<1x8x1xf32>
    tpu.vector_store %arg10[%c3_85, %c0_86, %c0_87], %149 {strides = array<i32>} : memref<4x8x1xf32, #tpu.memory_space<vmem>>, vector<1x8x1xf32>,
    %c0_88 = arith.constant 0 : index
    %c24 = arith.constant 24 : index
    %150 = vector.load %arg12[%c0_88, %c24] : memref<8x32xf32, #tpu.memory_space<vmem>>, vector<8x8xf32>
    %151 = vector.broadcast %134 : vector<8x1xf32> to vector<8x8xf32>
    %152 = arith.mulf %151, %150 : vector<8x8xf32>
    %cst_89 = arith.constant dense<0.000000e+00> : vector<8x8xf32>
    %153 = tpu.matmul %137, %125, %cst_89 {dimension_numbers = #tpu.dot_dimension_numbers<[1], [0], [0], [1], [0, 0, 1, 1], [], []>} : vector<8x8xf32>, vector<8x8xf32>, vector<8x8xf32> -> vector<8x8xf32>
    %154 = arith.addf %152, %153 : vector<8x8xf32>
    %c0_90 = arith.constant 0 : index
    %c24_91 = arith.constant 24 : index
    %155 = vector.load %arg12[%c0_90, %c24_91] : memref<8x32xf32, #tpu.memory_space<vmem>>, vector<8x8xf32>
    tpu.vector_store %arg12[%c0_90, %c24_91], %154 {strides = array<i32>} : memref<8x32xf32, #tpu.memory_space<vmem>>, vector<8x8xf32>,
    %c0_i32_92 = arith.constant 0 : i32
    %156 = arith.cmpi eq, %arg2, %c0_i32_92 : i32
    %157 = arith.extui %156 : i1 to i32
    %c0_i32_93 = arith.constant 0 : i32
    %158 = arith.cmpi ne, %157, %c0_i32_93 : i32
    scf.if %158 {
      %c0_94 = arith.constant 0 : index
      %c0_95 = arith.constant 0 : index
      %c0_96 = arith.constant 0 : index
      %159 = vector.load %arg11[%c0_94, %c0_95, %c0_96] : memref<4x8x1xf32, #tpu.memory_space<vmem>>, vector<1x8x1xf32>
      %160 = vector.shape_cast %159 : vector<1x8x1xf32> to vector<8x1xf32>
      %161 = tpu.reciprocal %160 {approx = true} : vector<8x1xf32> -> vector<8x1xf32>
      %c0_97 = arith.constant 0 : index
      %c0_98 = arith.constant 0 : index
      %162 = vector.load %arg12[%c0_97, %c0_98] : memref<8x32xf32, #tpu.memory_space<vmem>>, vector<8x8xf32>
      %163 = vector.broadcast %161 : vector<8x1xf32> to vector<8x8xf32>
      %164 = arith.mulf %162, %163 : vector<8x8xf32>
      %c0_99 = arith.constant 0 : index
      %c0_100 = arith.constant 0 : index
      %165 = vector.load %arg12[%c0_99, %c0_100] : memref<8x32xf32, #tpu.memory_space<vmem>>, vector<8x8xf32>
      tpu.vector_store %arg12[%c0_99, %c0_100], %164 {strides = array<i32>} : memref<8x32xf32, #tpu.memory_space<vmem>>, vector<8x8xf32>,
      %c1_101 = arith.constant 1 : index
      %c0_102 = arith.constant 0 : index
      %c0_103 = arith.constant 0 : index
      %166 = vector.load %arg11[%c1_101, %c0_102, %c0_103] : memref<4x8x1xf32, #tpu.memory_space<vmem>>, vector<1x8x1xf32>
      %167 = vector.shape_cast %166 : vector<1x8x1xf32> to vector<8x1xf32>
      %168 = tpu.reciprocal %167 {approx = true} : vector<8x1xf32> -> vector<8x1xf32>
      %c0_104 = arith.constant 0 : index
      %c8_105 = arith.constant 8 : index
      %169 = vector.load %arg12[%c0_104, %c8_105] : memref<8x32xf32, #tpu.memory_space<vmem>>, vector<8x8xf32>
      %170 = vector.broadcast %168 : vector<8x1xf32> to vector<8x8xf32>
      %171 = arith.mulf %169, %170 : vector<8x8xf32>
      %c0_106 = arith.constant 0 : index
      %c8_107 = arith.constant 8 : index
      %172 = vector.load %arg12[%c0_106, %c8_107] : memref<8x32xf32, #tpu.memory_space<vmem>>, vector<8x8xf32>
      tpu.vector_store %arg12[%c0_106, %c8_107], %171 {strides = array<i32>} : memref<8x32xf32, #tpu.memory_space<vmem>>, vector<8x8xf32>,
      %c2_108 = arith.constant 2 : index
      %c0_109 = arith.constant 0 : index
      %c0_110 = arith.constant 0 : index
      %173 = vector.load %arg11[%c2_108, %c0_109, %c0_110] : memref<4x8x1xf32, #tpu.memory_space<vmem>>, vector<1x8x1xf32>
      %174 = vector.shape_cast %173 : vector<1x8x1xf32> to vector<8x1xf32>
      %175 = tpu.reciprocal %174 {approx = true} : vector<8x1xf32> -> vector<8x1xf32>
      %c0_111 = arith.constant 0 : index
      %c16_112 = arith.constant 16 : index
      %176 = vector.load %arg12[%c0_111, %c16_112] : memref<8x32xf32, #tpu.memory_space<vmem>>, vector<8x8xf32>
      %177 = vector.broadcast %175 : vector<8x1xf32> to vector<8x8xf32>
      %178 = arith.mulf %176, %177 : vector<8x8xf32>
      %c0_113 = arith.constant 0 : index
      %c16_114 = arith.constant 16 : index
      %179 = vector.load %arg12[%c0_113, %c16_114] : memref<8x32xf32, #tpu.memory_space<vmem>>, vector<8x8xf32>
      tpu.vector_store %arg12[%c0_113, %c16_114], %178 {strides = array<i32>} : memref<8x32xf32, #tpu.memory_space<vmem>>, vector<8x8xf32>,
      %c3_115 = arith.constant 3 : index
      %c0_116 = arith.constant 0 : index
      %c0_117 = arith.constant 0 : index
      %180 = vector.load %arg11[%c3_115, %c0_116, %c0_117] : memref<4x8x1xf32, #tpu.memory_space<vmem>>, vector<1x8x1xf32>
      %181 = vector.shape_cast %180 : vector<1x8x1xf32> to vector<8x1xf32>
      %182 = tpu.reciprocal %181 {approx = true} : vector<8x1xf32> -> vector<8x1xf32>
      %c0_118 = arith.constant 0 : index
      %c24_119 = arith.constant 24 : index
      %183 = vector.load %arg12[%c0_118, %c24_119] : memref<8x32xf32, #tpu.memory_space<vmem>>, vector<8x8xf32>
      %184 = vector.broadcast %182 : vector<8x1xf32> to vector<8x8xf32>
      %185 = arith.mulf %183, %184 : vector<8x8xf32>
      %c0_120 = arith.constant 0 : index
      %c24_121 = arith.constant 24 : index
      %186 = vector.load %arg12[%c0_120, %c24_121] : memref<8x32xf32, #tpu.memory_space<vmem>>, vector<8x8xf32>
      tpu.vector_store %arg12[%c0_120, %c24_121], %185 {strides = array<i32>} : memref<8x32xf32, #tpu.memory_space<vmem>>, vector<8x8xf32>,
      %c0_122 = arith.constant 0 : index
      %c0_123 = arith.constant 0 : index
      %187 = vector.load %arg12[%c0_122, %c0_123] : memref<8x32xf32, #tpu.memory_space<vmem>>, vector<8x32xf32>
      %c0_124 = arith.constant 0 : index
      %c0_125 = arith.constant 0 : index
      %188 = vector.load %arg7[%c0_124, %c0_125] : memref<32x32xf32, #tpu.memory_space<vmem>>, vector<32x32xf32>
      %cst_126 = arith.constant dense<0.000000e+00> : vector<8x32xf32>
      %189 = tpu.matmul %187, %188, %cst_126 {dimension_numbers = #tpu.dot_dimension_numbers<[1], [0], [0], [1], [0, 0, 1, 1], [], []>} : vector<8x32xf32>, vector<32x32xf32>, vector<8x32xf32> -> vector<8x32xf32>
      %c0_127 = arith.constant 0 : index
      %c0_128 = arith.constant 0 : index
      %190 = vector.load %arg8[%c0_127, %c0_128] : memref<1x32xf32, #tpu.memory_space<vmem>>, vector<1x32xf32>
      %191 = vector.broadcast %190 : vector<1x32xf32> to vector<8x32xf32>
      %192 = arith.addf %189, %191 : vector<8x32xf32>
      %c0_129 = arith.constant 0 : index
      %c0_130 = arith.constant 0 : index
      %c0_131 = arith.constant 0 : index
      %193 = vector.load %arg9[%c0_129, %c0_130, %c0_131] : memref<1x8x32xf32, #tpu.memory_space<vmem>>, vector<1x8x32xf32>
      %194 = vector.shape_cast %193 : vector<1x8x32xf32> to vector<8x32xf32>
      %195 = vector.shape_cast %192 : vector<8x32xf32> to vector<1x8x32xf32>
      tpu.vector_store %arg9[%c0_129, %c0_130, %c0_131], %195 {strides = array<i32>} : memref<1x8x32xf32, #tpu.memory_space<vmem>>, vector<1x8x32xf32>,
    } else {
    }
    return
  }
  func.func @transform_0(%arg0: i32, %arg1: i32, %arg2: i32) -> (i32, i32, i32) {
    %c0_i32 = arith.constant 0 : i32
    %c0_i32_0 = arith.constant 0 : i32
    return %arg0, %arg2, %c0_i32 : i32, i32, i32
  }
  func.func @transform_1(%arg0: i32, %arg1: i32, %arg2: i32) -> (i32, i32, i32) {
    %c0_i32 = arith.constant 0 : i32
    %c0_i32_0 = arith.constant 0 : i32
    return %arg0, %arg2, %c0_i32 : i32, i32, i32
  }
  func.func @transform_2(%arg0: i32, %arg1: i32, %arg2: i32) -> (i32, i32, i32) {
    %c0_i32 = arith.constant 0 : i32
    %c0_i32_0 = arith.constant 0 : i32
    return %arg0, %arg1, %c0_i32 : i32, i32, i32
  }
  func.func @transform_3(%arg0: i32, %arg1: i32, %arg2: i32) -> (i32, i32, i32) {
    %c0_i32 = arith.constant 0 : i32
    return %arg0, %arg1, %arg2 : i32, i32, i32
  }
  func.func @transform_4(%arg0: i32, %arg1: i32, %arg2: i32) -> (i32, i32) {
    %c0_i32 = arith.constant 0 : i32
    %c0_i32_0 = arith.constant 0 : i32
    %c0_i32_1 = arith.constant 0 : i32
    return %c0_i32, %c0_i32_0 : i32, i32
  }
  func.func @transform_5(%arg0: i32, %arg1: i32, %arg2: i32) -> (i32, i32) {
    %c0_i32 = arith.constant 0 : i32
    %c0_i32_0 = arith.constant 0 : i32
    %c0_i32_1 = arith.constant 0 : i32
    return %c0_i32, %c0_i32_0 : i32, i32
  }
  func.func @transform_6(%arg0: i32, %arg1: i32, %arg2: i32) -> (i32, i32, i32) {
    %c0_i32 = arith.constant 0 : i32
    %c0_i32_0 = arith.constant 0 : i32
    return %arg0, %arg1, %c0_i32 : i32, i32, i32
  }
}

</mosaic_0001>

<llo_original>
// kernel: tpu_custom_call.1
$region0: #{tpu_custom_call.1}
  #allocation0 [shape = 'u32[]', space=smem, size = 0x4, offset = 0x4, fixed_abs, tag = 'smem constant byte address 0x4 - core index']
  #allocation1 [shape = 'u32[144,128]{1,0:T(1,128)}', space=vmem, size = 0x12000, scoped, tag = 'internal scratch']
  #allocation2 [shape = 'f32[4,8,1]{2,1,0:T(8,128)}', space=vmem, size = 0x4000, scoped, tag = 'scratch operand']
  #allocation3 [shape = 'f32[4,8,1]{2,1,0:T(8,128)}', space=vmem, size = 0x4000, scoped, tag = 'scratch operand']
  #allocation4 [shape = 'f32[8,32]{1,0:T(8,128)}', space=vmem, size = 0x1000, scoped, tag = 'scratch operand']
  %s0 = inlined_call_operand.hbm [shape: f32[2,8,32], index: 0, kind: input, shape index: {}]
  %s1 = inlined_call_operand.hbm [shape: f32[2,8,32], index: 1, kind: input, shape index: {}]
  %s2 = inlined_call_operand.hbm [shape: f32[2,8,32], index: 2, kind: input, shape index: {}]
  %s3 = inlined_call_operand.hbm [shape: s32[2,8,8], index: 3, kind: input, shape index: {}]
  %s4 = inlined_call_operand.hbm [shape: f32[32,32], index: 4, kind: input, shape index: {}]
  %s5 = inlined_call_operand.vmem [shape: f32[1,32], index: 5, kind: input, shape index: {}]
  %s6 = inlined_call_operand.hbm [shape: f32[2,8,32], index: 6, kind: output, shape index: {}]
  %s7 = sld [smem:[#allocation0]]
  $region85: #{tpu_custom_call.1} parent=0
    _
  %s9 = ssub.s32 1, %s7
  %s10 = scalar_select 0, %s9, %s7
  $region1: #{tpu_custom_call.1} parent=0
    #allocation5 [shape = 'u8[8192]{0}', space=vmem, size = 0x2000, scoped, tag = 'input window, operand 0']
    #allocation6 [shape = 's32[2]{0}', space=sflag, size = 0x8, scoped, tag = 'scoped memory for tpu_custom_call.1']
    #allocation7 [shape = 's32[2]{0}', space=sflag, size = 0x8, scoped, tag = 'scoped memory for tpu_custom_call.1']
    #allocation8 [shape = 'u8[8192]{0}', space=vmem, size = 0x2000, scoped, tag = 'input window, operand 1']
    #allocation9 [shape = 's32[2]{0}', space=sflag, size = 0x8, scoped, tag = 'scoped memory for tpu_custom_call.1']
    #allocation10 [shape = 'u8[8192]{0}', space=vmem, size = 0x2000, scoped, tag = 'input window, operand 2']
    #allocation11 [shape = 'u8[8192]{0}', space=vmem, size = 0x2000, scoped, tag = 'input window, operand 3']
    #allocation12 [shape = 's32[2]{0}', space=sflag, size = 0x8, scoped, tag = 'scoped memory for tpu_custom_call.1']
    #allocation13 [shape = 'u8[16384]{0}', space=vmem, size = 0x4000, scoped, tag = 'input window, operand 4, single buffered']
    #allocation14 [shape = 'u8[8192]{0}', space=vmem, size = 0x2000, scoped, tag = 'output window, operand 0']
    %11 = vsyncpa [#allocation6], 0
    %s12 = scalar_lea.sflag [#allocation6], 1
    %13 = vsyncpa %s12, 0
    %14 = vsyncpa [#allocation9], 0
    %s15 = scalar_lea.sflag [#allocation9], 1
    %16 = vsyncpa %s15, 0
    %17 = vsyncpa [#allocation12], 0
    %s18 = scalar_lea.sflag [#allocation12], 1
    %19 = vsyncpa %s18, 0
    %20 = vsyncpa [#allocation7], 0
    %s21 = scalar_lea.sflag [#allocation7], 1
    %22 = vsyncpa %s21, 0
    loop: start=0, step=1, limit=4
    $region2: #{tpu_custom_call.1} parent=1 // loop_pre_header
      _
    $region3: #{tpu_custom_call.1} parent=1 // loop_header
      %s24 = sphi 0, %s28
      %p25 = scmp.ge.s32.totalorder %s24, 4
      %s31 = sphi 0, %s50
      %s32 = sphi 0, %s46
      %s33 = sphi 0, %s42
      %s34 = sphi 0, %s31
      %s35 = sphi 0, %s32
      %s36 = sphi 0, %s33
      %s37 = sphi 0, %s34
      %s38 = sphi 0, %s35
      %s39 = sphi 0, %s36
      %s55 = sphi 0, %s57
      %s58 = sphi 0, %s55
      %s59 = sphi 0, %s58
      %s75 = sphi 0, %s59
      %s83 = sphi 0, %s85
      %s86 = sphi 0, %s83
      %s87 = sphi 0, %s86
      %s103 = sphi 0, %s87
      %s111 = sphi 0, %s113
      %s114 = sphi 0, %s111
      %s115 = sphi 0, %s114
      %s131 = sphi 0, %s115
      %s141 = sphi 0, %s143
      %s144 = sphi 0, %s141
      %s145 = sphi 0, %s144
      %s161 = sphi 0, %s145
      %s165 = sphi 0, %s165
      %s167 = sphi 0, %s165
      %s168 = sphi 0, %s167
      %s182 = sphi 0, %s168
      %s186 = sphi 0, %s186
      %s188 = sphi 0, %s186
      %s189 = sphi 0, %s188
      %s203 = sphi 0, %s189
      %s211 = sphi 0, %s213
      %s214 = sphi 0, %s211
      %s215 = sphi 0, %s214
      %s231 = sphi 0, %s215
    $region4: #{tpu_custom_call.1} parent=1 // loop_header_branch
      %27 = sbr.rel (%p25) target = $region8
    $region5: #{tpu_custom_call.1} parent=1 // loop_body
      %s29 = ssub.s32 %s24, 1
      %s30 = ssub.s32 %s24, 2
      %s40 = sadd.s32 1, %s33
      %p41 = scmp.ge.s32.totalorder %s40, 1
      %s42 = scalar_select %p41, 0, %s40
      %s43 = sadd.s32 1, %s32
      %s44 = scalar_select %p41, %s43, %s32
      %p45 = scmp.ge.s32.totalorder %s44, 1
      %s46 = scalar_select %p45, 0, %s44
      %s47 = sadd.s32 1, %s31
      %s48 = scalar_select %p45, %s47, %s31
      %p49 = scmp.ge.s32.totalorder %s48, 2
      %s50 = scalar_select %p49, 0, %s48
      %s51 = ssub.s32 %s31, %s50
      %s52 = ssub.s32 %s33, %s42
      %s53 = sor.u32 %s51, %s52
      %p54 = scmp.eq.s32.totalorder %s53, 0
      %s56 = sadd.s32 %s55, 1
      %s57 = scalar_select %p54, %s55, %s56
      %p60 = pneg %p54
      %p61 = scmp.eq.s32.totalorder %s24, 1
      %p62 = por %p60, %p61
      %p63 = scmp.ne.s32.totalorder %s55, %s58
      %p64 = scmp.eq.s32.totalorder %s24, 0
      %p65 = por %p63, %p64
      %p66 = scmp.ne.s32.totalorder %s55, %s58
      %p67 = scmp.eq.s32.totalorder %s29, 1
      %p68 = por %p66, %p67
      %p69 = scmp.ne.s32.totalorder %s58, %s59
      %p70 = scmp.eq.s32.totalorder %s29, 0
      %p71 = por %p69, %p70
      %p72 = scmp.ne.s32.totalorder %s58, %s59
      %p73 = scmp.eq.s32.totalorder %s30, 1
      %p74 = por %p72, %p73
      %p76 = scmp.ne.s32.totalorder %s59, %s75
      %p77 = scmp.eq.s32.totalorder %s30, 0
      %p78 = por %p76, %p77
      %s79 = ssub.s32 %s31, %s50
      %s80 = ssub.s32 %s33, %s42
      %s81 = sor.u32 %s79, %s80
      %p82 = scmp.eq.s32.totalorder %s81, 0
      %s84 = sadd.s32 %s83, 1
      %s85 = scalar_select %p82, %s83, %s84
      %p88 = pneg %p82
      %p89 = scmp.eq.s32.totalorder %s24, 1
      %p90 = por %p88, %p89
      %p91 = scmp.ne.s32.totalorder %s83, %s86
      %p92 = scmp.eq.s32.totalorder %s24, 0
      %p93 = por %p91, %p92
      %p94 = scmp.ne.s32.totalorder %s83, %s86
      %p95 = scmp.eq.s32.totalorder %s29, 1
      %p96 = por %p94, %p95
      %p97 = scmp.ne.s32.totalorder %s86, %s87
      %p98 = scmp.eq.s32.totalorder %s29, 0
      %p99 = por %p97, %p98
      %p100 = scmp.ne.s32.totalorder %s86, %s87
      %p101 = scmp.eq.s32.totalorder %s30, 1
      %p102 = por %p100, %p101
      %p104 = scmp.ne.s32.totalorder %s87, %s103
      %p105 = scmp.eq.s32.totalorder %s30, 0
      %p106 = por %p104, %p105
      %s107 = ssub.s32 %s31, %s50
      %s108 = ssub.s32 %s32, %s46
      %s109 = sor.u32 %s107, %s108
      %p110 = scmp.eq.s32.totalorder %s109, 0
      %s112 = sadd.s32 %s111, 1
      %s113 = scalar_select %p110, %s111, %s112
      %p116 = pneg %p110
      %p117 = scmp.eq.s32.totalorder %s24, 1
      %p118 = por %p116, %p117
      %p119 = scmp.ne.s32.totalorder %s111, %s114
      %p120 = scmp.eq.s32.totalorder %s24, 0
      %p121 = por %p119, %p120
      %p122 = scmp.ne.s32.totalorder %s111, %s114
      %p123 = scmp.eq.s32.totalorder %s29, 1
      %p124 = por %p122, %p123
      %p125 = scmp.ne.s32.totalorder %s114, %s115
      %p126 = scmp.eq.s32.totalorder %s29, 0
      %p127 = por %p125, %p126
      %p128 = scmp.ne.s32.totalorder %s114, %s115
      %p129 = scmp.eq.s32.totalorder %s30, 1
      %p130 = por %p128, %p129
      %p132 = scmp.ne.s32.totalorder %s115, %s131
      %p133 = scmp.eq.s32.totalorder %s30, 0
      %p134 = por %p132, %p133
      %s135 = ssub.s32 %s31, %s50
      %s136 = ssub.s32 %s32, %s46
      %s137 = sor.u32 %s135, %s136
      %s138 = ssub.s32 %s33, %s42
      %s139 = sor.u32 %s137, %s138
      %p140 = scmp.eq.s32.totalorder %s139, 0
      %s142 = sadd.s32 %s141, 1
      %s143 = scalar_select %p140, %s141, %s142
      %p146 = pneg %p140
      %p147 = scmp.eq.s32.totalorder %s24, 1
      %p148 = por %p146, %p147
      %p149 = scmp.ne.s32.totalorder %s141, %s144
      %p150 = scmp.eq.s32.totalorder %s24, 0
      %p151 = por %p149, %p150
      %p152 = scmp.ne.s32.totalorder %s141, %s144
      %p153 = scmp.eq.s32.totalorder %s29, 1
      %p154 = por %p152, %p153
      %p155 = scmp.ne.s32.totalorder %s144, %s145
      %p156 = scmp.eq.s32.totalorder %s29, 0
      %p157 = por %p155, %p156
      %p158 = scmp.ne.s32.totalorder %s144, %s145
      %p159 = scmp.eq.s32.totalorder %s30, 1
      %p160 = por %p158, %p159
      %p162 = scmp.ne.s32.totalorder %s145, %s161
      %p163 = scmp.eq.s32.totalorder %s30, 0
      %p164 = por %p162, %p163
      %s166 = sadd.s32 %s165, 1
      %p169 = scmp.eq.s32.totalorder %s24, 1
      %p170 = scmp.ne.s32.totalorder %s165, %s167
      %p171 = scmp.eq.s32.totalorder %s24, 0
      %p172 = por %p170, %p171
      %p173 = scmp.ne.s32.totalorder %s165, %s167
      %p174 = scmp.eq.s32.totalorder %s29, 1
      %p175 = por %p173, %p174
      %p176 = scmp.ne.s32.totalorder %s167, %s168
      %p177 = scmp.eq.s32.totalorder %s29, 0
      %p178 = por %p176, %p177
      %p179 = scmp.ne.s32.totalorder %s167, %s168
      %p180 = scmp.eq.s32.totalorder %s30, 1
      %p181 = por %p179, %p180
      %p183 = scmp.ne.s32.totalorder %s168, %s182
      %p184 = scmp.eq.s32.totalorder %s30, 0
      %p185 = por %p183, %p184
      %s187 = sadd.s32 %s186, 1
      %p190 = scmp.eq.s32.totalorder %s24, 1
      %p191 = scmp.ne.s32.totalorder %s186, %s188
      %p192 = scmp.eq.s32.totalorder %s24, 0
      %p193 = por %p191, %p192
      %p194 = scmp.ne.s32.totalorder %s186, %s188
      %p195 = scmp.eq.s32.totalorder %s29, 1
      %p196 = por %p194, %p195
      %p197 = scmp.ne.s32.totalorder %s188, %s189
      %p198 = scmp.eq.s32.totalorder %s29, 0
      %p199 = por %p197, %p198
      %p200 = scmp.ne.s32.totalorder %s188, %s189
      %p201 = scmp.eq.s32.totalorder %s30, 1
      %p202 = por %p200, %p201
      %p204 = scmp.ne.s32.totalorder %s189, %s203
      %p205 = scmp.eq.s32.totalorder %s30, 0
      %p206 = por %p204, %p205
      %s207 = ssub.s32 %s31, %s50
      %s208 = ssub.s32 %s32, %s46
      %s209 = sor.u32 %s207, %s208
      %p210 = scmp.eq.s32.totalorder %s209, 0
      %s212 = sadd.s32 %s211, 1
      %s213 = scalar_select %p210, %s211, %s212
      %p216 = pneg %p210
      %p217 = scmp.eq.s32.totalorder %s24, 1
      %p218 = por %p216, %p217
      %p219 = scmp.ne.s32.totalorder %s211, %s214
      %p220 = scmp.eq.s32.totalorder %s24, 0
      %p221 = por %p219, %p220
      %p222 = scmp.ne.s32.totalorder %s211, %s214
      %p223 = scmp.eq.s32.totalorder %s29, 1
      %p224 = por %p222, %p223
      %p225 = scmp.ne.s32.totalorder %s214, %s215
      %p226 = scmp.eq.s32.totalorder %s29, 0
      %p227 = por %p225, %p226
      %p228 = scmp.ne.s32.totalorder %s214, %s215
      %p229 = scmp.eq.s32.totalorder %s30, 1
      %p230 = por %p228, %p229
      %p232 = scmp.ne.s32.totalorder %s215, %s231
      %p233 = scmp.eq.s32.totalorder %s30, 0
      %p234 = por %p232, %p233
      %p235 = scmp.le.s32.totalorder 1, %s24
      %p236 = scmp.lt.s32.totalorder %s24, 3
      %p237 = pnand %p235, %p236
      %p238 = pneg %p237
      // Predicated region
      $region9: #{tpu_custom_call.1} parent=5 // pred_check
        _
      $region10: #{tpu_custom_call.1} parent=5 // pred_check_branch
        %240 = sbr.rel (%p237) target = $region12
      $region11: #{tpu_custom_call.1} parent=5 // pred_region
        %s241 = ssub.s32 %s24, 1
        // Predicated region
        $region13: #{tpu_custom_call.1} parent=11 // pred_check
          %p242 = pneg %p178
        $region14: #{tpu_custom_call.1} parent=11 // pred_check_branch
          %244 = sbr.rel (%p242) target = $region16
        $region15: #{tpu_custom_call.1} parent=11 // pred_region
          %s246 = ssub.s32 512, 512
          %247 = vsyncadd [#allocation12], %s246
          %s248 = sshll.u32 [#allocation13], 4
          %s249 = int_to_ptr.vmem [resolvable:$true] %s248
          %254 = dma.hbm_to_vmem [thread:$0]  %s4, 512, %s249, [#allocation12], 128, 128, 8
        $region16: #{tpu_custom_call.1} parent=11 // pred_fallthru
          _
        // Predicated region
        $region17: #{tpu_custom_call.1} parent=11 // pred_check
          %p255 = pneg %p199
        $region18: #{tpu_custom_call.1} parent=11 // pred_check_branch
          %257 = sbr.rel (%p255) target = $region20
        $region19: #{tpu_custom_call.1} parent=11 // pred_region
          _
        $region20: #{tpu_custom_call.1} parent=11 // pred_fallthru
          _
      $region12: #{tpu_custom_call.1} parent=5 // pred_fallthru
        _
      %p258 = scmp.lt.s32.totalorder %s24, 2
      // Predicated region
      $region21: #{tpu_custom_call.1} parent=5 // pred_check
        %p259 = pneg %p258
      $region22: #{tpu_custom_call.1} parent=5 // pred_check_branch
        %261 = sbr.rel (%p259) target = $region24
      $region23: #{tpu_custom_call.1} parent=5 // pred_region
        // Predicated region
        $region25: #{tpu_custom_call.1} parent=23 // pred_check
          %p262 = pneg %p65
        $region26: #{tpu_custom_call.1} parent=23 // pred_check_branch
          %264 = sbr.rel (%p262) target = $region28
        $region27: #{tpu_custom_call.1} parent=23 // pred_region
          %s265 = sand.u32 %s55, 1
          %s266 = scalar_lea.sflag [#allocation6], %s265
          %s267 = sand.u32 %s55, 1
          %s268 = smul.addr %s267, 8
          %s269 = scalar_lea.vmem [#allocation5], %s268
          %s271 = ssub.s32 128, 128
          %272 = vsyncadd %s266, %s271
          %s273 = sadd.s32 %s33, %s31
          %s274 = smul.addr %s273, 128
          %s275 = scalar_lea.hbm %s0, %s274
          %s277 = sshll.u32 %s269, 4
          %s278 = int_to_ptr.vmem [resolvable:$true] %s277
          %280 = dma.hbm_to_vmem [thread:$0]  %s275, 128, %s278, %s266
        $region28: #{tpu_custom_call.1} parent=23 // pred_fallthru
          _
        // Predicated region
        $region29: #{tpu_custom_call.1} parent=23 // pred_check
          %p281 = pneg %p93
        $region30: #{tpu_custom_call.1} parent=23 // pred_check_branch
          %283 = sbr.rel (%p281) target = $region32
        $region31: #{tpu_custom_call.1} parent=23 // pred_region
          %s284 = sand.u32 %s24, 1
          %s285 = scalar_lea.sflag [#allocation9], %s284
          %s286 = sand.u32 %s83, 1
          %s287 = smul.addr %s286, 8
          %s288 = scalar_lea.vmem [#allocation8], %s287
          %s290 = ssub.s32 128, 128
          %291 = vsyncadd %s285, %s290
          %s292 = sadd.s32 %s33, %s31
          %s293 = smul.addr %s292, 128
          %s294 = scalar_lea.hbm %s1, %s293
          %s296 = sshll.u32 %s288, 4
          %s297 = int_to_ptr.vmem [resolvable:$true] %s296
          %299 = dma.hbm_to_vmem [thread:$0]  %s294, 128, %s297, %s285
        $region32: #{tpu_custom_call.1} parent=23 // pred_fallthru
          _
        // Predicated region
        $region33: #{tpu_custom_call.1} parent=23 // pred_check
          %p300 = pneg %p121
        $region34: #{tpu_custom_call.1} parent=23 // pred_check_branch
          %302 = sbr.rel (%p300) target = $region36
        $region35: #{tpu_custom_call.1} parent=23 // pred_region
          %s303 = sand.u32 %s24, 1
          %s304 = scalar_lea.sflag [#allocation9], %s303
          %s305 = sand.u32 %s111, 1
          %s306 = smul.addr %s305, 8
          %s307 = scalar_lea.vmem [#allocation10], %s306
          %s309 = ssub.s32 128, 128
          %310 = vsyncadd %s304, %s309
          %s311 = sadd.s32 %s32, %s31
          %s312 = smul.addr %s311, 128
          %s313 = scalar_lea.hbm %s2, %s312
          %s315 = sshll.u32 %s307, 4
          %s316 = int_to_ptr.vmem [resolvable:$true] %s315
          %318 = dma.hbm_to_vmem [thread:$0]  %s313, 128, %s316, %s304
        $region36: #{tpu_custom_call.1} parent=23 // pred_fallthru
          _
        // Predicated region
        $region37: #{tpu_custom_call.1} parent=23 // pred_check
          %p319 = pneg %p151
        $region38: #{tpu_custom_call.1} parent=23 // pred_check_branch
          %321 = sbr.rel (%p319) target = $region40
        $region39: #{tpu_custom_call.1} parent=23 // pred_region
          %s322 = sand.u32 %s24, 1
          %s323 = scalar_lea.sflag [#allocation12], %s322
          %s324 = sand.u32 %s141, 1
          %s325 = smul.addr %s324, 8
          %s326 = scalar_lea.vmem [#allocation11], %s325
          %s328 = ssub.s32 128, 128
          %329 = vsyncadd %s323, %s328
          %s330 = sadd.s32 %s33, %s32
          %s331 = sadd.s32 %s330, %s31
          %s332 = smul.addr %s331, 128
          %s333 = scalar_lea.hbm %s3, %s332
          %s335 = sshll.u32 %s326, 4
          %s336 = int_to_ptr.vmem [resolvable:$true] %s335
          %338 = dma.hbm_to_vmem [thread:$0]  %s333, 128, %s336, %s323
        $region40: #{tpu_custom_call.1} parent=23 // pred_fallthru
          _
      $region24: #{tpu_custom_call.1} parent=5 // pred_fallthru
        _
      %p339 = scmp.le.s32.totalorder 1, %s24
      %p340 = scmp.lt.s32.totalorder %s24, 3
      %p341 = pnand %p339, %p340
      %p342 = pneg %p341
      // Predicated region
      $region41: #{tpu_custom_call.1} parent=5 // pred_check
        _
      $region42: #{tpu_custom_call.1} parent=5 // pred_check_branch
        %344 = sbr.rel (%p341) target = $region44
      $region43: #{tpu_custom_call.1} parent=5 // pred_region
        %s345 = ssub.s32 %s24, 1
        %s346 = sand.u32 %s58, 1
        %s347 = scalar_lea.sflag [#allocation6], %s346
        %s348 = sand.u32 %s58, 1
        %s349 = smul.addr %s348, 8
        %s350 = scalar_lea.vmem [#allocation5], %s349
        // Predicated region
        $region45: #{tpu_custom_call.1} parent=43 // pred_check
          %p351 = pneg %p71
        $region46: #{tpu_custom_call.1} parent=43 // pred_check_branch
          %353 = sbr.rel (%p351) target = $region48
        $region47: #{tpu_custom_call.1} parent=43 // pred_region
          %354 = dma.done %s347, 128
        $region48: #{tpu_custom_call.1} parent=43 // pred_fallthru
          _
        %s355 = sand.u32 %s29, 1
        %s356 = scalar_lea.sflag [#allocation9], %s355
        %s357 = sand.u32 %s86, 1
        %s358 = smul.addr %s357, 8
        %s359 = scalar_lea.vmem [#allocation8], %s358
        // Predicated region
        $region49: #{tpu_custom_call.1} parent=43 // pred_check
          %p360 = pneg %p99
        $region50: #{tpu_custom_call.1} parent=43 // pred_check_branch
          %362 = sbr.rel (%p360) target = $region52
        $region51: #{tpu_custom_call.1} parent=43 // pred_region
          %363 = dma.done %s356, 128
        $region52: #{tpu_custom_call.1} parent=43 // pred_fallthru
          _
        %s364 = sand.u32 %s29, 1
        %s365 = scalar_lea.sflag [#allocation9], %s364
        %s366 = sand.u32 %s114, 1
        %s367 = smul.addr %s366, 8
        %s368 = scalar_lea.vmem [#allocation10], %s367
        // Predicated region
        $region53: #{tpu_custom_call.1} parent=43 // pred_check
          %p369 = pneg %p127
        $region54: #{tpu_custom_call.1} parent=43 // pred_check_branch
          %371 = sbr.rel (%p369) target = $region56
        $region55: #{tpu_custom_call.1} parent=43 // pred_region
          %372 = dma.done %s365, 128
        $region56: #{tpu_custom_call.1} parent=43 // pred_fallthru
          _
        %s373 = sand.u32 %s29, 1
        %s374 = scalar_lea.sflag [#allocation12], %s373
        %s375 = sand.u32 %s144, 1
        %s376 = smul.addr %s375, 8
        %s377 = scalar_lea.vmem [#allocation11], %s376
        // Predicated region
        $region57: #{tpu_custom_call.1} parent=43 // pred_check
          %p378 = pneg %p157
        $region58: #{tpu_custom_call.1} parent=43 // pred_check_branch
          %380 = sbr.rel (%p378) target = $region60
        $region59: #{tpu_custom_call.1} parent=43 // pred_region
          %381 = dma.done %s374, 128
        $region60: #{tpu_custom_call.1} parent=43 // pred_fallthru
          _
        // Predicated region
        $region61: #{tpu_custom_call.1} parent=43 // pred_check
          %p382 = pneg %p178
        $region62: #{tpu_custom_call.1} parent=43 // pred_check_branch
          %384 = sbr.rel (%p382) target = $region64
        $region63: #{tpu_custom_call.1} parent=43 // pred_region
          %385 = dma.done [#allocation12], 512
        $region64: #{tpu_custom_call.1} parent=43 // pred_fallthru
          _
        %s386 = sand.u32 %s58, 1
        %s387 = scalar_lea.sflag [#allocation6], %s386
        %s388 = sand.u32 %s58, 1
        %s389 = smul.addr %s388, 8
        %s390 = scalar_lea.vmem [#allocation5], %s389
        %p391 = pneg %p71
        %p392 = pneg %p68
        %s393 = sand.u32 %s29, 1
        %s394 = scalar_lea.sflag [#allocation9], %s393
        %s395 = sand.u32 %s86, 1
        %s396 = smul.addr %s395, 8
        %s397 = scalar_lea.vmem [#allocation8], %s396
        %p398 = pneg %p99
        %p399 = pneg %p96
        %s400 = sand.u32 %s29, 1
        %s401 = scalar_lea.sflag [#allocation9], %s400
        %s402 = sand.u32 %s114, 1
        %s403 = smul.addr %s402, 8
        %s404 = scalar_lea.vmem [#allocation10], %s403
        %p405 = pneg %p127
        %p406 = pneg %p124
        %s407 = sand.u32 %s29, 1
        %s408 = scalar_lea.sflag [#allocation12], %s407
        %s409 = sand.u32 %s144, 1
        %s410 = smul.addr %s409, 8
        %s411 = scalar_lea.vmem [#allocation11], %s410
        %p412 = pneg %p157
        %p413 = pneg %p154
        %p414 = pneg %p178
        %p415 = pneg %p175
        %p416 = pneg %p199
        %p417 = pneg %p196
        %p418 = pneg %p227
        %p419 = pneg %p224
        %s420 = sand.u32 %s214, 1
        %s421 = scalar_lea.sflag [#allocation7], %s420
        %s422 = sand.u32 %s214, 1
        %s423 = smul.addr %s422, 8
        %s424 = scalar_lea.vmem [#allocation14], %s423
        %p425 = scmp.eq.s32.totalorder %s36, 0
        // Predicated region
        $region65: #{tpu_custom_call.1} parent=43 // pred_check
          %p426 = pneg %p425
        $region66: #{tpu_custom_call.1} parent=43 // pred_check_branch
          %428 = sbr.rel (%p426) target = $region68
        $region67: #{tpu_custom_call.1} parent=43 // pred_region
          %vm429 = vcmask 7168
          %430 = vst.msk [vmem:[#allocation2] sm:$0xff] %vm429, -1e+30
          %431 = vst.msk [vmem:[#allocation2 + $0x8] sm:$0xff] %vm429, -1e+30
          %432 = vst.msk [vmem:[#allocation2 + $0x10] sm:$0xff] %vm429, -1e+30
          %433 = vst.msk [vmem:[#allocation2 + $0x18] sm:$0xff] %vm429, -1e+30
          %434 = vst.msk [vmem:[#allocation3] sm:$0xff] %vm429, 0.0
          %435 = vst.msk [vmem:[#allocation3 + $0x8] sm:$0xff] %vm429, 0.0
          %436 = vst.msk [vmem:[#allocation3 + $0x10] sm:$0xff] %vm429, 0.0
          %437 = vst.msk [vmem:[#allocation3 + $0x18] sm:$0xff] %vm429, 0.0
          %vm438 = vcmask 261120
          %439 = vst.msk [vmem:[#allocation4] sm:$0xff] %vm438, 0.0
        $region68: #{tpu_custom_call.1} parent=43 // pred_fallthru
          _
        %v440 = vld [vmem:[%s368] sm:$0xff]
        %v441 = vld [vmem:[%s359] sm:$0xff]
        %v442 = vld [vmem:[%s350] sm:$0xff]
        %v443 = vld [vmem:[%s377] sm:$0xff]
        %vm444 = vcmp.eq.s32.totalorder %v443, 0
        %v445 = vsel %vm444, -1e+30, 0.0
        %v446 = vmul.f32 %v440, 0.17677669
        %vm447 = vcmask 64512
        %v449 = vsel %vm447, %v446, 0
        %v452 = vsel %vm447, %v441, 0
        %454 = vmatprep.subr.mxu0 0.0
        %455 = vmatpush1.xpose.msra.mxu0 %v452
        %456 = vmatprep.subr.mxu0 0.0
        %457 = vmatpush1.xpose.msra.mxu0 0.0
        %458 = vmatprep.subr.mxu0 0.0
        %459 = vmatpush1.xpose.msra.mxu0 0.0
        %460 = vmatprep.subr.mxu0 0.0
        %461 = vmatpush1.xpose.msra.mxu0 0.0
        %462 = vmatprep.subr.mxu0 0.0
        %463 = vmatpush1.xpose.msra.mxu0 0.0
        %464 = vmatprep.subr.mxu0 0.0
        %465 = vmatpush1.xpose.msra.mxu0 0.0
        %466 = vmatprep.subr.mxu0 0.0
        %467 = vmatpush1.xpose.msra.mxu0 0.0
        %468 = vmatprep.subr.mxu0 0.0
        %469 = vmatpush1.xpose.msra.mxu0 0.0
        %470 = vmatprep.subr.mxu0 0.0
        %471 = vmatpush1.xpose.msra.mxu0 0.0
        %472 = vmatprep.subr.mxu0 0.0
        %473 = vmatpush1.xpose.msra.mxu0 0.0
        %474 = vmatprep.subr.mxu0 0.0
        %475 = vmatpush1.xpose.msra.mxu0 0.0
        %476 = vmatprep.subr.mxu0 0.0
        %477 = vmatpush1.xpose.msra.mxu0 0.0
        %478 = vmatprep.subr.mxu0 0.0
        %479 = vmatpush1.xpose.msra.mxu0 0.0
        %480 = vmatprep.subr.mxu0 0.0
        %481 = vmatpush1.xpose.msra.mxu0 0.0
        %482 = vmatprep.subr.mxu0 0.0
        %483 = vmatpush1.xpose.msra.mxu0 0.0
        %484 = vmatprep.subr.mxu0 0.0
        %485 = vmatpush1.xpose.msra.mxu0 0.0
        %486 = vmatprep.subr.mxu0 0.0
        %487 = vmatpush1.xpose.msra.mxu0 0.0
        %488 = vmatprep.subr.mxu0 0.0
        %489 = vmatpush1.xpose.msra.mxu0 0.0
        %490 = vmatprep.subr.mxu0 0.0
        %491 = vmatpush1.xpose.msra.mxu0 0.0
        %492 = vmatprep.subr.mxu0 0.0
        %493 = vmatpush1.xpose.msra.mxu0 0.0
        %494 = vmatprep.subr.mxu0 0.0
        %495 = vmatpush1.xpose.msra.mxu0 0.0
        %496 = vmatprep.subr.mxu0 0.0
        %497 = vmatpush1.xpose.msra.mxu0 0.0
        %498 = vmatprep.subr.mxu0 0.0
        %499 = vmatpush1.xpose.msra.mxu0 0.0
        %500 = vmatprep.subr.mxu0 0.0
        %501 = vmatpush1.xpose.msra.mxu0 0.0
        %502 = vmatprep.subr.mxu0 0.0
        %503 = vmatpush1.xpose.msra.mxu0 0.0
        %504 = vmatprep.subr.mxu0 0.0
        %505 = vmatpush1.xpose.msra.mxu0 0.0
        %506 = vmatprep.subr.mxu0 0.0
        %507 = vmatpush1.xpose.msra.mxu0 0.0
        %508 = vmatprep.subr.mxu0 0.0
        %509 = vmatpush1.xpose.msra.mxu0 0.0
        %510 = vmatprep.subr.mxu0 0.0
        %511 = vmatpush1.xpose.msra.mxu0 0.0
        %512 = vmatprep.subr.mxu0 0.0
        %513 = vmatpush1.xpose.msra.mxu0 0.0
        %514 = vmatprep.subr.mxu0 0.0
        %515 = vmatpush1.xpose.msra.mxu0 0.0
        %516 = vmatprep.subr.mxu0 0.0
        %517 = vmatpush1.xpose.msra.mxu0 0.0
        %518 = vmatprep.mubr.f32.mxu0 0.0
        %519 = vmatmul.mubr.f32.gmra.mrb[0].mxu0 %v449
        %v520 = vpop.f32.mrb[0].mxu0
        %v521 = vadd.f32 %v445, %v520
        %v522 = vpop.f32.mrb[0].mxu0
        %523 = vdwg.mxu0
        %v524 = vld [vmem:[#allocation2] sm:$0xff]
        %v525 = vsel %vm447, %v521, -inf
        %526 = vmax.xlane.f32.xlu0 %v525
        %v527 = vpop.xlane.xlu0 %526
        %v528 = vmax.f32 %v524, %v527
        %v529 = vsub.f32 %v524, %v528
        %v530 = vmul.f32 %v529, 1.442695
        %v531 = vpow.pop %v530
        %533 = vset.pattern.permute.xlu0 0
        %534 = vperm.xlu0 %533, %v528
        %v535 = vpop.permute.xlu0 %534
        %v537 = vsub.f32 %v521, %v535
        %v538 = vmul.f32 %v537, 1.442695
        %v539 = vpow.pop %v538
        %v540 = vld [vmem:[#allocation3] sm:$0xff]
        %v541 = vmul.f32 %v531, %v540
        %v542 = vsel %vm447, %v539, 0.0
        %543 = vadd.xlane.f32.xlu0 %v542
        %v544 = vpop.xlane.xlu0 %543
        %v545 = vadd.f32 %v541, %v544
        %vm546 = vcmask 7168
        %547 = vst.msk [vmem:[#allocation3] sm:$0xff] %vm546, %v545
        %548 = vst.msk [vmem:[#allocation2] sm:$0xff] %vm546, %v528
        %v549 = vld [vmem:[#allocation4] sm:$0xff]
        %551 = vset.pattern.permute.xlu0 0
        %552 = vperm.xlu0 %551, %v531
        %v553 = vpop.permute.xlu0 %552
        %v555 = vmul.f32 %v553, %v549
        %v557 = vsel %vm447, %v539, 0
        %559 = vmatprep.subr.mxu0 0.0
        %560 = vmatpush1.msra.mxu0 %v442
        %561 = vmatprep.subr.mxu0 0.0
        %562 = vmatpush1.msra.mxu0 0.0
        %563 = vmatprep.subr.mxu0 0.0
        %564 = vmatpush1.msra.mxu0 0.0
        %565 = vmatprep.subr.mxu0 0.0
        %566 = vmatpush1.msra.mxu0 0.0
        %567 = vmatprep.subr.mxu0 0.0
        %568 = vmatpush1.msra.mxu0 0.0
        %569 = vmatprep.subr.mxu0 0.0
        %570 = vmatpush1.msra.mxu0 0.0
        %571 = vmatprep.subr.mxu0 0.0
        %572 = vmatpush1.msra.mxu0 0.0
        %573 = vmatprep.subr.mxu0 0.0
        %574 = vmatpush1.msra.mxu0 0.0
        %575 = vmatprep.subr.mxu0 0.0
        %576 = vmatpush1.msra.mxu0 0.0
        %577 = vmatprep.subr.mxu0 0.0
        %578 = vmatpush1.msra.mxu0 0.0
        %579 = vmatprep.subr.mxu0 0.0
        %580 = vmatpush1.msra.mxu0 0.0
        %581 = vmatprep.subr.mxu0 0.0
        %582 = vmatpush1.msra.mxu0 0.0
        %583 = vmatprep.subr.mxu0 0.0
        %584 = vmatpush1.msra.mxu0 0.0
        %585 = vmatprep.subr.mxu0 0.0
        %586 = vmatpush1.msra.mxu0 0.0
        %587 = vmatprep.subr.mxu0 0.0
        %588 = vmatpush1.msra.mxu0 0.0
        %589 = vmatprep.subr.mxu0 0.0
        %590 = vmatpush1.msra.mxu0 0.0
        %591 = vmatprep.subr.mxu0 0.0
        %592 = vmatpush1.msra.mxu0 0.0
        %593 = vmatprep.subr.mxu0 0.0
        %594 = vmatpush1.msra.mxu0 0.0
        %595 = vmatprep.subr.mxu0 0.0
        %596 = vmatpush1.msra.mxu0 0.0
        %597 = vmatprep.subr.mxu0 0.0
        %598 = vmatpush1.msra.mxu0 0.0
        %599 = vmatprep.subr.mxu0 0.0
        %600 = vmatpush1.msra.mxu0 0.0
        %601 = vmatprep.subr.mxu0 0.0
        %602 = vmatpush1.msra.mxu0 0.0
        %603 = vmatprep.subr.mxu0 0.0
        %604 = vmatpush1.msra.mxu0 0.0
        %605 = vmatprep.subr.mxu0 0.0
        %606 = vmatpush1.msra.mxu0 0.0
        %607 = vmatprep.subr.mxu0 0.0
        %608 = vmatpush1.msra.mxu0 0.0
        %609 = vmatprep.subr.mxu0 0.0
        %610 = vmatpush1.msra.mxu0 0.0
        %611 = vmatprep.subr.mxu0 0.0
        %612 = vmatpush1.msra.mxu0 0.0
        %613 = vmatprep.subr.mxu0 0.0
        %614 = vmatpush1.msra.mxu0 0.0
        %615 = vmatprep.subr.mxu0 0.0
        %616 = vmatpush1.msra.mxu0 0.0
        %617 = vmatprep.subr.mxu0 0.0
        %618 = vmatpush1.msra.mxu0 0.0
        %619 = vmatprep.subr.mxu0 0.0
        %620 = vmatpush1.msra.mxu0 0.0
        %621 = vmatprep.subr.mxu0 0.0
        %622 = vmatpush1.msra.mxu0 0.0
        %623 = vmatprep.mubr.f32.mxu0 0.0
        %624 = vmatmul.mubr.f32.gmra.mrb[0].mxu0 %v557
        %v625 = vpop.f32.mrb[0].mxu0
        %v626 = vadd.f32 0.0, %v625
        %v627 = vpop.f32.mrb[0].mxu0
        %628 = vdwg.mxu0
        %v629 = vadd.f32 %v555, %v626
        %630 = vst.msk [vmem:[#allocation4] sm:$0xff] %vm447, %v629
        %631 = vrot.lane.b32.xlu0 %v446, 120
        %v632 = vpop.permute.xlu0 %631
        %633 = vrot.lane.b32.xlu0 %v441, 120
        %v634 = vpop.permute.xlu0 %633
        %v635 = vsel %vm447, %v632, 0
        %v637 = vsel %vm447, %v634, 0
        %639 = vmatprep.subr.mxu0 0.0
        %640 = vmatpush1.xpose.msra.mxu0 %v637
        %641 = vmatprep.subr.mxu0 0.0
        %642 = vmatpush1.xpose.msra.mxu0 0.0
        %643 = vmatprep.subr.mxu0 0.0
        %644 = vmatpush1.xpose.msra.mxu0 0.0
        %645 = vmatprep.subr.mxu0 0.0
        %646 = vmatpush1.xpose.msra.mxu0 0.0
        %647 = vmatprep.subr.mxu0 0.0
        %648 = vmatpush1.xpose.msra.mxu0 0.0
        %649 = vmatprep.subr.mxu0 0.0
        %650 = vmatpush1.xpose.msra.mxu0 0.0
        %651 = vmatprep.subr.mxu0 0.0
        %652 = vmatpush1.xpose.msra.mxu0 0.0
        %653 = vmatprep.subr.mxu0 0.0
        %654 = vmatpush1.xpose.msra.mxu0 0.0
        %655 = vmatprep.subr.mxu0 0.0
        %656 = vmatpush1.xpose.msra.mxu0 0.0
        %657 = vmatprep.subr.mxu0 0.0
        %658 = vmatpush1.xpose.msra.mxu0 0.0
        %659 = vmatprep.subr.mxu0 0.0
        %660 = vmatpush1.xpose.msra.mxu0 0.0
        %661 = vmatprep.subr.mxu0 0.0
        %662 = vmatpush1.xpose.msra.mxu0 0.0
        %663 = vmatprep.subr.mxu0 0.0
        %664 = vmatpush1.xpose.msra.mxu0 0.0
        %665 = vmatprep.subr.mxu0 0.0
        %666 = vmatpush1.xpose.msra.mxu0 0.0
        %667 = vmatprep.subr.mxu0 0.0
        %668 = vmatpush1.xpose.msra.mxu0 0.0
        %669 = vmatprep.subr.mxu0 0.0
        %670 = vmatpush1.xpose.msra.mxu0 0.0
        %671 = vmatprep.subr.mxu0 0.0
        %672 = vmatpush1.xpose.msra.mxu0 0.0
        %673 = vmatprep.subr.mxu0 0.0
        %674 = vmatpush1.xpose.msra.mxu0 0.0
        %675 = vmatprep.subr.mxu0 0.0
        %676 = vmatpush1.xpose.msra.mxu0 0.0
        %677 = vmatprep.subr.mxu0 0.0
        %678 = vmatpush1.xpose.msra.mxu0 0.0
        %679 = vmatprep.subr.mxu0 0.0
        %680 = vmatpush1.xpose.msra.mxu0 0.0
        %681 = vmatprep.subr.mxu0 0.0
        %682 = vmatpush1.xpose.msra.mxu0 0.0
        %683 = vmatprep.subr.mxu0 0.0
        %684 = vmatpush1.xpose.msra.mxu0 0.0
        %685 = vmatprep.subr.mxu0 0.0
        %686 = vmatpush1.xpose.msra.mxu0 0.0
        %687 = vmatprep.subr.mxu0 0.0
        %688 = vmatpush1.xpose.msra.mxu0 0.0
        %689 = vmatprep.subr.mxu0 0.0
        %690 = vmatpush1.xpose.msra.mxu0 0.0
        %691 = vmatprep.subr.mxu0 0.0
        %692 = vmatpush1.xpose.msra.mxu0 0.0
        %693 = vmatprep.subr.mxu0 0.0
        %694 = vmatpush1.xpose.msra.mxu0 0.0
        %695 = vmatprep.subr.mxu0 0.0
        %696 = vmatpush1.xpose.msra.mxu0 0.0
        %697 = vmatprep.subr.mxu0 0.0
        %698 = vmatpush1.xpose.msra.mxu0 0.0
        %699 = vmatprep.subr.mxu0 0.0
        %700 = vmatpush1.xpose.msra.mxu0 0.0
        %701 = vmatprep.subr.mxu0 0.0
        %702 = vmatpush1.xpose.msra.mxu0 0.0
        %703 = vmatprep.mubr.f32.mxu0 0.0
        %704 = vmatmul.mubr.f32.gmra.mrb[0].mxu0 %v635
        %v705 = vpop.f32.mrb[0].mxu0
        %v706 = vadd.f32 %v445, %v705
        %v707 = vpop.f32.mrb[0].mxu0
        %708 = vdwg.mxu0
        %s709 = scalar_lea.vmem [#allocation2], 8
        %v710 = vld [vmem:[%s709] sm:$0xff]
        %v711 = vsel %vm447, %v706, -inf
        %712 = vmax.xlane.f32.xlu0 %v711
        %v713 = vpop.xlane.xlu0 %712
        %v714 = vmax.f32 %v710, %v713
        %v715 = vsub.f32 %v710, %v714
        %v716 = vmul.f32 %v715, 1.442695
        %v717 = vpow.pop %v716
        %719 = vset.pattern.permute.xlu0 0
        %720 = vperm.xlu0 %719, %v714
        %v721 = vpop.permute.xlu0 %720
        %v723 = vsub.f32 %v706, %v721
        %v724 = vmul.f32 %v723, 1.442695
        %v725 = vpow.pop %v724
        %s726 = scalar_lea.vmem [#allocation3], 8
        %v727 = vld [vmem:[%s726] sm:$0xff]
        %v728 = vmul.f32 %v717, %v727
        %v729 = vsel %vm447, %v725, 0.0
        %730 = vadd.xlane.f32.xlu0 %v729
        %v731 = vpop.xlane.xlu0 %730
        %v732 = vadd.f32 %v728, %v731
        %733 = vst.msk [vmem:[%s726] sm:$0xff] %vm546, %v732
        %734 = vst.msk [vmem:[%s709] sm:$0xff] %vm546, %v714
        %v735 = vld [vmem:[#allocation4] sm:$0xff]
        %737 = vset.pattern.permute.xlu0 0
        %738 = vperm.xlu0 %737, %v717
        %v739 = vpop.permute.xlu0 %738
        %v741 = vmul.f32 %v739, %v735
        %743 = vrot.lane.b32.xlu0 %v442, 120
        %v744 = vpop.permute.xlu0 %743
        %v747 = vsel %vm447, %v725, 0
        %749 = vmatprep.subr.mxu0 0.0
        %750 = vmatpush1.msra.mxu0 %v744
        %751 = vmatprep.subr.mxu0 0.0
        %752 = vmatpush1.msra.mxu0 0.0
        %753 = vmatprep.subr.mxu0 0.0
        %754 = vmatpush1.msra.mxu0 0.0
        %755 = vmatprep.subr.mxu0 0.0
        %756 = vmatpush1.msra.mxu0 0.0
        %757 = vmatprep.subr.mxu0 0.0
        %758 = vmatpush1.msra.mxu0 0.0
        %759 = vmatprep.subr.mxu0 0.0
        %760 = vmatpush1.msra.mxu0 0.0
        %761 = vmatprep.subr.mxu0 0.0
        %762 = vmatpush1.msra.mxu0 0.0
        %763 = vmatprep.subr.mxu0 0.0
        %764 = vmatpush1.msra.mxu0 0.0
        %765 = vmatprep.subr.mxu0 0.0
        %766 = vmatpush1.msra.mxu0 0.0
        %767 = vmatprep.subr.mxu0 0.0
        %768 = vmatpush1.msra.mxu0 0.0
        %769 = vmatprep.subr.mxu0 0.0
        %770 = vmatpush1.msra.mxu0 0.0
        %771 = vmatprep.subr.mxu0 0.0
        %772 = vmatpush1.msra.mxu0 0.0
        %773 = vmatprep.subr.mxu0 0.0
        %774 = vmatpush1.msra.mxu0 0.0
        %775 = vmatprep.subr.mxu0 0.0
        %776 = vmatpush1.msra.mxu0 0.0
        %777 = vmatprep.subr.mxu0 0.0
        %778 = vmatpush1.msra.mxu0 0.0
        %779 = vmatprep.subr.mxu0 0.0
        %780 = vmatpush1.msra.mxu0 0.0
        %781 = vmatprep.subr.mxu0 0.0
        %782 = vmatpush1.msra.mxu0 0.0
        %783 = vmatprep.subr.mxu0 0.0
        %784 = vmatpush1.msra.mxu0 0.0
        %785 = vmatprep.subr.mxu0 0.0
        %786 = vmatpush1.msra.mxu0 0.0
        %787 = vmatprep.subr.mxu0 0.0
        %788 = vmatpush1.msra.mxu0 0.0
        %789 = vmatprep.subr.mxu0 0.0
        %790 = vmatpush1.msra.mxu0 0.0
        %791 = vmatprep.subr.mxu0 0.0
        %792 = vmatpush1.msra.mxu0 0.0
        %793 = vmatprep.subr.mxu0 0.0
        %794 = vmatpush1.msra.mxu0 0.0
        %795 = vmatprep.subr.mxu0 0.0
        %796 = vmatpush1.msra.mxu0 0.0
        %797 = vmatprep.subr.mxu0 0.0
        %798 = vmatpush1.msra.mxu0 0.0
        %799 = vmatprep.subr.mxu0 0.0
        %800 = vmatpush1.msra.mxu0 0.0
        %801 = vmatprep.subr.mxu0 0.0
        %802 = vmatpush1.msra.mxu0 0.0
        %803 = vmatprep.subr.mxu0 0.0
        %804 = vmatpush1.msra.mxu0 0.0
        %805 = vmatprep.subr.mxu0 0.0
        %806 = vmatpush1.msra.mxu0 0.0
        %807 = vmatprep.subr.mxu0 0.0
        %808 = vmatpush1.msra.mxu0 0.0
        %809 = vmatprep.subr.mxu0 0.0
        %810 = vmatpush1.msra.mxu0 0.0
        %811 = vmatprep.subr.mxu0 0.0
        %812 = vmatpush1.msra.mxu0 0.0
        %813 = vmatprep.mubr.f32.mxu0 0.0
        %814 = vmatmul.mubr.f32.gmra.mrb[0].mxu0 %v747
        %v815 = vpop.f32.mrb[0].mxu0
        %v816 = vadd.f32 0.0, %v815
        %v817 = vpop.f32.mrb[0].mxu0
        %818 = vdwg.mxu0
        %820 = vrot.lane.b32.xlu0 %v816, 8
        %v821 = vpop.permute.xlu0 %820
        %v823 = vadd.f32 %v741, %v821
        %vm824 = vcmask 130112
        %825 = vst.msk [vmem:[#allocation4] sm:$0xff] %vm824, %v823
        %826 = vrot.lane.b32.xlu0 %v446, 112
        %v827 = vpop.permute.xlu0 %826
        %828 = vrot.lane.b32.xlu0 %v441, 112
        %v829 = vpop.permute.xlu0 %828
        %v830 = vsel %vm447, %v827, 0
        %v832 = vsel %vm447, %v829, 0
        %834 = vmatprep.subr.mxu0 0.0
        %835 = vmatpush1.xpose.msra.mxu0 %v832
        %836 = vmatprep.subr.mxu0 0.0
        %837 = vmatpush1.xpose.msra.mxu0 0.0
        %838 = vmatprep.subr.mxu0 0.0
        %839 = vmatpush1.xpose.msra.mxu0 0.0
        %840 = vmatprep.subr.mxu0 0.0
        %841 = vmatpush1.xpose.msra.mxu0 0.0
        %842 = vmatprep.subr.mxu0 0.0
        %843 = vmatpush1.xpose.msra.mxu0 0.0
        %844 = vmatprep.subr.mxu0 0.0
        %845 = vmatpush1.xpose.msra.mxu0 0.0
        %846 = vmatprep.subr.mxu0 0.0
        %847 = vmatpush1.xpose.msra.mxu0 0.0
        %848 = vmatprep.subr.mxu0 0.0
        %849 = vmatpush1.xpose.msra.mxu0 0.0
        %850 = vmatprep.subr.mxu0 0.0
        %851 = vmatpush1.xpose.msra.mxu0 0.0
        %852 = vmatprep.subr.mxu0 0.0
        %853 = vmatpush1.xpose.msra.mxu0 0.0
        %854 = vmatprep.subr.mxu0 0.0
        %855 = vmatpush1.xpose.msra.mxu0 0.0
        %856 = vmatprep.subr.mxu0 0.0
        %857 = vmatpush1.xpose.msra.mxu0 0.0
        %858 = vmatprep.subr.mxu0 0.0
        %859 = vmatpush1.xpose.msra.mxu0 0.0
        %860 = vmatprep.subr.mxu0 0.0
        %861 = vmatpush1.xpose.msra.mxu0 0.0
        %862 = vmatprep.subr.mxu0 0.0
        %863 = vmatpush1.xpose.msra.mxu0 0.0
        %864 = vmatprep.subr.mxu0 0.0
        %865 = vmatpush1.xpose.msra.mxu0 0.0
        %866 = vmatprep.subr.mxu0 0.0
        %867 = vmatpush1.xpose.msra.mxu0 0.0
        %868 = vmatprep.subr.mxu0 0.0
        %869 = vmatpush1.xpose.msra.mxu0 0.0
        %870 = vmatprep.subr.mxu0 0.0
        %871 = vmatpush1.xpose.msra.mxu0 0.0
        %872 = vmatprep.subr.mxu0 0.0
        %873 = vmatpush1.xpose.msra.mxu0 0.0
        %874 = vmatprep.subr.mxu0 0.0
        %875 = vmatpush1.xpose.msra.mxu0 0.0
        %876 = vmatprep.subr.mxu0 0.0
        %877 = vmatpush1.xpose.msra.mxu0 0.0
        %878 = vmatprep.subr.mxu0 0.0
        %879 = vmatpush1.xpose.msra.mxu0 0.0
        %880 = vmatprep.subr.mxu0 0.0
        %881 = vmatpush1.xpose.msra.mxu0 0.0
        %882 = vmatprep.subr.mxu0 0.0
        %883 = vmatpush1.xpose.msra.mxu0 0.0
        %884 = vmatprep.subr.mxu0 0.0
        %885 = vmatpush1.xpose.msra.mxu0 0.0
        %886 = vmatprep.subr.mxu0 0.0
        %887 = vmatpush1.xpose.msra.mxu0 0.0
        %888 = vmatprep.subr.mxu0 0.0
        %889 = vmatpush1.xpose.msra.mxu0 0.0
        %890 = vmatprep.subr.mxu0 0.0
        %891 = vmatpush1.xpose.msra.mxu0 0.0
        %892 = vmatprep.subr.mxu0 0.0
        %893 = vmatpush1.xpose.msra.mxu0 0.0
        %894 = vmatprep.subr.mxu0 0.0
        %895 = vmatpush1.xpose.msra.mxu0 0.0
        %896 = vmatprep.subr.mxu0 0.0
        %897 = vmatpush1.xpose.msra.mxu0 0.0
        %898 = vmatprep.mubr.f32.mxu0 0.0
        %899 = vmatmul.mubr.f32.gmra.mrb[0].mxu0 %v830
        %v900 = vpop.f32.mrb[0].mxu0
        %v901 = vadd.f32 %v445, %v900
        %v902 = vpop.f32.mrb[0].mxu0
        %903 = vdwg.mxu0
        %s904 = scalar_lea.vmem [#allocation2], 16
        %v905 = vld [vmem:[%s904] sm:$0xff]
        %v906 = vsel %vm447, %v901, -inf
        %907 = vmax.xlane.f32.xlu0 %v906
        %v908 = vpop.xlane.xlu0 %907
        %v909 = vmax.f32 %v905, %v908
        %v910 = vsub.f32 %v905, %v909
        %v911 = vmul.f32 %v910, 1.442695
        %v912 = vpow.pop %v911
        %914 = vset.pattern.permute.xlu0 0
        %915 = vperm.xlu0 %914, %v909
        %v916 = vpop.permute.xlu0 %915
        %v918 = vsub.f32 %v901, %v916
        %v919 = vmul.f32 %v918, 1.442695
        %v920 = vpow.pop %v919
        %s921 = scalar_lea.vmem [#allocation3], 16
        %v922 = vld [vmem:[%s921] sm:$0xff]
        %v923 = vmul.f32 %v912, %v922
        %v924 = vsel %vm447, %v920, 0.0
        %925 = vadd.xlane.f32.xlu0 %v924
        %v926 = vpop.xlane.xlu0 %925
        %v927 = vadd.f32 %v923, %v926
        %928 = vst.msk [vmem:[%s921] sm:$0xff] %vm546, %v927
        %929 = vst.msk [vmem:[%s904] sm:$0xff] %vm546, %v909
        %v930 = vld [vmem:[#allocation4] sm:$0xff]
        %932 = vset.pattern.permute.xlu0 0
        %933 = vperm.xlu0 %932, %v912
        %v934 = vpop.permute.xlu0 %933
        %v936 = vmul.f32 %v934, %v930
        %937 = vrot.lane.b32.xlu0 %v442, 112
        %v938 = vpop.permute.xlu0 %937
        %v941 = vsel %vm447, %v920, 0
        %943 = vmatprep.subr.mxu0 0.0
        %944 = vmatpush1.msra.mxu0 %v938
        %945 = vmatprep.subr.mxu0 0.0
        %946 = vmatpush1.msra.mxu0 0.0
        %947 = vmatprep.subr.mxu0 0.0
        %948 = vmatpush1.msra.mxu0 0.0
        %949 = vmatprep.subr.mxu0 0.0
        %950 = vmatpush1.msra.mxu0 0.0
        %951 = vmatprep.subr.mxu0 0.0
        %952 = vmatpush1.msra.mxu0 0.0
        %953 = vmatprep.subr.mxu0 0.0
        %954 = vmatpush1.msra.mxu0 0.0
        %955 = vmatprep.subr.mxu0 0.0
        %956 = vmatpush1.msra.mxu0 0.0
        %957 = vmatprep.subr.mxu0 0.0
        %958 = vmatpush1.msra.mxu0 0.0
        %959 = vmatprep.subr.mxu0 0.0
        %960 = vmatpush1.msra.mxu0 0.0
        %961 = vmatprep.subr.mxu0 0.0
        %962 = vmatpush1.msra.mxu0 0.0
        %963 = vmatprep.subr.mxu0 0.0
        %964 = vmatpush1.msra.mxu0 0.0
        %965 = vmatprep.subr.mxu0 0.0
        %966 = vmatpush1.msra.mxu0 0.0
        %967 = vmatprep.subr.mxu0 0.0
        %968 = vmatpush1.msra.mxu0 0.0
        %969 = vmatprep.subr.mxu0 0.0
        %970 = vmatpush1.msra.mxu0 0.0
        %971 = vmatprep.subr.mxu0 0.0
        %972 = vmatpush1.msra.mxu0 0.0
        %973 = vmatprep.subr.mxu0 0.0
        %974 = vmatpush1.msra.mxu0 0.0
        %975 = vmatprep.subr.mxu0 0.0
        %976 = vmatpush1.msra.mxu0 0.0
        %977 = vmatprep.subr.mxu0 0.0
        %978 = vmatpush1.msra.mxu0 0.0
        %979 = vmatprep.subr.mxu0 0.0
        %980 = vmatpush1.msra.mxu0 0.0
        %981 = vmatprep.subr.mxu0 0.0
        %982 = vmatpush1.msra.mxu0 0.0
        %983 = vmatprep.subr.mxu0 0.0
        %984 = vmatpush1.msra.mxu0 0.0
        %985 = vmatprep.subr.mxu0 0.0
        %986 = vmatpush1.msra.mxu0 0.0
        %987 = vmatprep.subr.mxu0 0.0
        %988 = vmatpush1.msra.mxu0 0.0
        %989 = vmatprep.subr.mxu0 0.0
        %990 = vmatpush1.msra.mxu0 0.0
        %991 = vmatprep.subr.mxu0 0.0
        %992 = vmatpush1.msra.mxu0 0.0
        %993 = vmatprep.subr.mxu0 0.0
        %994 = vmatpush1.msra.mxu0 0.0
        %995 = vmatprep.subr.mxu0 0.0
        %996 = vmatpush1.msra.mxu0 0.0
        %997 = vmatprep.subr.mxu0 0.0
        %998 = vmatpush1.msra.mxu0 0.0
        %999 = vmatprep.subr.mxu0 0.0
        %1000 = vmatpush1.msra.mxu0 0.0
        %1001 = vmatprep.subr.mxu0 0.0
        %1002 = vmatpush1.msra.mxu0 0.0
        %1003 = vmatprep.subr.mxu0 0.0
        %1004 = vmatpush1.msra.mxu0 0.0
        %1005 = vmatprep.subr.mxu0 0.0
        %1006 = vmatpush1.msra.mxu0 0.0
        %1007 = vmatprep.mubr.f32.mxu0 0.0
        %1008 = vmatmul.mubr.f32.gmra.mrb[0].mxu0 %v941
        %v1009 = vpop.f32.mrb[0].mxu0
        %v1010 = vadd.f32 0.0, %v1009
        %v1011 = vpop.f32.mrb[0].mxu0
        %1012 = vdwg.mxu0
        %1014 = vrot.lane.b32.xlu0 %v1010, 16
        %v1015 = vpop.permute.xlu0 %1014
        %v1017 = vadd.f32 %v936, %v1015
        %vm1018 = vcmask 195712
        %1019 = vst.msk [vmem:[#allocation4] sm:$0xff] %vm1018, %v1017
        %1020 = vrot.lane.b32.xlu0 %v446, 104
        %v1021 = vpop.permute.xlu0 %1020
        %1022 = vrot.lane.b32.xlu0 %v441, 104
        %v1023 = vpop.permute.xlu0 %1022
        %v1024 = vsel %vm447, %v1021, 0
        %v1026 = vsel %vm447, %v1023, 0
        %1028 = vmatprep.subr.mxu0 0.0
        %1029 = vmatpush1.xpose.msra.mxu0 %v1026
        %1030 = vmatprep.subr.mxu0 0.0
        %1031 = vmatpush1.xpose.msra.mxu0 0.0
        %1032 = vmatprep.subr.mxu0 0.0
        %1033 = vmatpush1.xpose.msra.mxu0 0.0
        %1034 = vmatprep.subr.mxu0 0.0
        %1035 = vmatpush1.xpose.msra.mxu0 0.0
        %1036 = vmatprep.subr.mxu0 0.0
        %1037 = vmatpush1.xpose.msra.mxu0 0.0
        %1038 = vmatprep.subr.mxu0 0.0
        %1039 = vmatpush1.xpose.msra.mxu0 0.0
        %1040 = vmatprep.subr.mxu0 0.0
        %1041 = vmatpush1.xpose.msra.mxu0 0.0
        %1042 = vmatprep.subr.mxu0 0.0
        %1043 = vmatpush1.xpose.msra.mxu0 0.0
        %1044 = vmatprep.subr.mxu0 0.0
        %1045 = vmatpush1.xpose.msra.mxu0 0.0
        %1046 = vmatprep.subr.mxu0 0.0
        %1047 = vmatpush1.xpose.msra.mxu0 0.0
        %1048 = vmatprep.subr.mxu0 0.0
        %1049 = vmatpush1.xpose.msra.mxu0 0.0
        %1050 = vmatprep.subr.mxu0 0.0
        %1051 = vmatpush1.xpose.msra.mxu0 0.0
        %1052 = vmatprep.subr.mxu0 0.0
        %1053 = vmatpush1.xpose.msra.mxu0 0.0
        %1054 = vmatprep.subr.mxu0 0.0
        %1055 = vmatpush1.xpose.msra.mxu0 0.0
        %1056 = vmatprep.subr.mxu0 0.0
        %1057 = vmatpush1.xpose.msra.mxu0 0.0
        %1058 = vmatprep.subr.mxu0 0.0
        %1059 = vmatpush1.xpose.msra.mxu0 0.0
        %1060 = vmatprep.subr.mxu0 0.0
        %1061 = vmatpush1.xpose.msra.mxu0 0.0
        %1062 = vmatprep.subr.mxu0 0.0
        %1063 = vmatpush1.xpose.msra.mxu0 0.0
        %1064 = vmatprep.subr.mxu0 0.0
        %1065 = vmatpush1.xpose.msra.mxu0 0.0
        %1066 = vmatprep.subr.mxu0 0.0
        %1067 = vmatpush1.xpose.msra.mxu0 0.0
        %1068 = vmatprep.subr.mxu0 0.0
        %1069 = vmatpush1.xpose.msra.mxu0 0.0
        %1070 = vmatprep.subr.mxu0 0.0
        %1071 = vmatpush1.xpose.msra.mxu0 0.0
        %1072 = vmatprep.subr.mxu0 0.0
        %1073 = vmatpush1.xpose.msra.mxu0 0.0
        %1074 = vmatprep.subr.mxu0 0.0
        %1075 = vmatpush1.xpose.msra.mxu0 0.0
        %1076 = vmatprep.subr.mxu0 0.0
        %1077 = vmatpush1.xpose.msra.mxu0 0.0
        %1078 = vmatprep.subr.mxu0 0.0
        %1079 = vmatpush1.xpose.msra.mxu0 0.0
        %1080 = vmatprep.subr.mxu0 0.0
        %1081 = vmatpush1.xpose.msra.mxu0 0.0
        %1082 = vmatprep.subr.mxu0 0.0
        %1083 = vmatpush1.xpose.msra.mxu0 0.0
        %1084 = vmatprep.subr.mxu0 0.0
        %1085 = vmatpush1.xpose.msra.mxu0 0.0
        %1086 = vmatprep.subr.mxu0 0.0
        %1087 = vmatpush1.xpose.msra.mxu0 0.0
        %1088 = vmatprep.subr.mxu0 0.0
        %1089 = vmatpush1.xpose.msra.mxu0 0.0
        %1090 = vmatprep.subr.mxu0 0.0
        %1091 = vmatpush1.xpose.msra.mxu0 0.0
        %1092 = vmatprep.mubr.f32.mxu0 0.0
        %1093 = vmatmul.mubr.f32.gmra.mrb[0].mxu0 %v1024
        %v1094 = vpop.f32.mrb[0].mxu0
        %v1095 = vadd.f32 %v445, %v1094
        %v1096 = vpop.f32.mrb[0].mxu0
        %1097 = vdwg.mxu0
        %s1098 = scalar_lea.vmem [#allocation2], 24
        %v1099 = vld [vmem:[%s1098] sm:$0xff]
        %v1100 = vsel %vm447, %v1095, -inf
        %1101 = vmax.xlane.f32.xlu0 %v1100
        %v1102 = vpop.xlane.xlu0 %1101
        %v1103 = vmax.f32 %v1099, %v1102
        %v1104 = vsub.f32 %v1099, %v1103
        %v1105 = vmul.f32 %v1104, 1.442695
        %v1106 = vpow.pop %v1105
        %1108 = vset.pattern.permute.xlu0 0
        %1109 = vperm.xlu0 %1108, %v1103
        %v1110 = vpop.permute.xlu0 %1109
        %v1112 = vsub.f32 %v1095, %v1110
        %v1113 = vmul.f32 %v1112, 1.442695
        %v1114 = vpow.pop %v1113
        %s1115 = scalar_lea.vmem [#allocation3], 24
        %v1116 = vld [vmem:[%s1115] sm:$0xff]
        %v1117 = vmul.f32 %v1106, %v1116
        %v1118 = vsel %vm447, %v1114, 0.0
        %1119 = vadd.xlane.f32.xlu0 %v1118
        %v1120 = vpop.xlane.xlu0 %1119
        %v1121 = vadd.f32 %v1117, %v1120
        %1122 = vst.msk [vmem:[%s1115] sm:$0xff] %vm546, %v1121
        %1123 = vst.msk [vmem:[%s1098] sm:$0xff] %vm546, %v1103
        %v1124 = vld [vmem:[#allocation4] sm:$0xff]
        %1126 = vset.pattern.permute.xlu0 0
        %1127 = vperm.xlu0 %1126, %v1106
        %v1128 = vpop.permute.xlu0 %1127
        %v1130 = vmul.f32 %v1128, %v1124
        %1131 = vrot.lane.b32.xlu0 %v442, 104
        %v1132 = vpop.permute.xlu0 %1131
        %v1135 = vsel %vm447, %v1114, 0
        %1137 = vmatprep.subr.mxu0 0.0
        %1138 = vmatpush1.msra.mxu0 %v1132
        %1139 = vmatprep.subr.mxu0 0.0
        %1140 = vmatpush1.msra.mxu0 0.0
        %1141 = vmatprep.subr.mxu0 0.0
        %1142 = vmatpush1.msra.mxu0 0.0
        %1143 = vmatprep.subr.mxu0 0.0
        %1144 = vmatpush1.msra.mxu0 0.0
        %1145 = vmatprep.subr.mxu0 0.0
        %1146 = vmatpush1.msra.mxu0 0.0
        %1147 = vmatprep.subr.mxu0 0.0
        %1148 = vmatpush1.msra.mxu0 0.0
        %1149 = vmatprep.subr.mxu0 0.0
        %1150 = vmatpush1.msra.mxu0 0.0
        %1151 = vmatprep.subr.mxu0 0.0
        %1152 = vmatpush1.msra.mxu0 0.0
        %1153 = vmatprep.subr.mxu0 0.0
        %1154 = vmatpush1.msra.mxu0 0.0
        %1155 = vmatprep.subr.mxu0 0.0
        %1156 = vmatpush1.msra.mxu0 0.0
        %1157 = vmatprep.subr.mxu0 0.0
        %1158 = vmatpush1.msra.mxu0 0.0
        %1159 = vmatprep.subr.mxu0 0.0
        %1160 = vmatpush1.msra.mxu0 0.0
        %1161 = vmatprep.subr.mxu0 0.0
        %1162 = vmatpush1.msra.mxu0 0.0
        %1163 = vmatprep.subr.mxu0 0.0
        %1164 = vmatpush1.msra.mxu0 0.0
        %1165 = vmatprep.subr.mxu0 0.0
        %1166 = vmatpush1.msra.mxu0 0.0
        %1167 = vmatprep.subr.mxu0 0.0
        %1168 = vmatpush1.msra.mxu0 0.0
        %1169 = vmatprep.subr.mxu0 0.0
        %1170 = vmatpush1.msra.mxu0 0.0
        %1171 = vmatprep.subr.mxu0 0.0
        %1172 = vmatpush1.msra.mxu0 0.0
        %1173 = vmatprep.subr.mxu0 0.0
        %1174 = vmatpush1.msra.mxu0 0.0
        %1175 = vmatprep.subr.mxu0 0.0
        %1176 = vmatpush1.msra.mxu0 0.0
        %1177 = vmatprep.subr.mxu0 0.0
        %1178 = vmatpush1.msra.mxu0 0.0
        %1179 = vmatprep.subr.mxu0 0.0
        %1180 = vmatpush1.msra.mxu0 0.0
        %1181 = vmatprep.subr.mxu0 0.0
        %1182 = vmatpush1.msra.mxu0 0.0
        %1183 = vmatprep.subr.mxu0 0.0
        %1184 = vmatpush1.msra.mxu0 0.0
        %1185 = vmatprep.subr.mxu0 0.0
        %1186 = vmatpush1.msra.mxu0 0.0
        %1187 = vmatprep.subr.mxu0 0.0
        %1188 = vmatpush1.msra.mxu0 0.0
        %1189 = vmatprep.subr.mxu0 0.0
        %1190 = vmatpush1.msra.mxu0 0.0
        %1191 = vmatprep.subr.mxu0 0.0
        %1192 = vmatpush1.msra.mxu0 0.0
        %1193 = vmatprep.subr.mxu0 0.0
        %1194 = vmatpush1.msra.mxu0 0.0
        %1195 = vmatprep.subr.mxu0 0.0
        %1196 = vmatpush1.msra.mxu0 0.0
        %1197 = vmatprep.subr.mxu0 0.0
        %1198 = vmatpush1.msra.mxu0 0.0
        %1199 = vmatprep.subr.mxu0 0.0
        %1200 = vmatpush1.msra.mxu0 0.0
        %1201 = vmatprep.mubr.f32.mxu0 0.0
        %1202 = vmatmul.mubr.f32.gmra.mrb[0].mxu0 %v1135
        %v1203 = vpop.f32.mrb[0].mxu0
        %v1204 = vadd.f32 0.0, %v1203
        %v1205 = vpop.f32.mrb[0].mxu0
        %1206 = vdwg.mxu0
        %1208 = vrot.lane.b32.xlu0 %v1204, 24
        %v1209 = vpop.permute.xlu0 %1208
        %v1211 = vadd.f32 %v1130, %v1209
        %vm1212 = vcmask 261312
        %1213 = vst.msk [vmem:[#allocation4] sm:$0xff] %vm1212, %v1211
        // Predicated region
        $region69: #{tpu_custom_call.1} parent=43 // pred_check
          %p1214 = pneg %p425
        $region70: #{tpu_custom_call.1} parent=43 // pred_check_branch
          %1216 = sbr.rel (%p1214) target = $region72
        $region71: #{tpu_custom_call.1} parent=43 // pred_region
          %v1217 = vld [vmem:[#allocation3] sm:$0xff]
          %v1218 = vrcp.pop %v1217
          %v1219 = vld [vmem:[#allocation4] sm:$0xff]
          %1221 = vset.pattern.permute.xlu0 0
          %1222 = vperm.xlu0 %1221, %v1218
          %v1223 = vpop.permute.xlu0 %1222
          %v1225 = vmul.f32 %v1219, %v1223
          %1226 = vst.msk [vmem:[#allocation4] sm:$0xff] %vm447, %v1225
          %v1227 = vld [vmem:[%s726] sm:$0xff]
          %v1228 = vrcp.pop %v1227
          %v1229 = vld [vmem:[#allocation4] sm:$0xff]
          %1231 = vset.pattern.permute.xlu0 0
          %1232 = vperm.xlu0 %1231, %v1228
          %v1233 = vpop.permute.xlu0 %1232
          %v1235 = vmul.f32 %v1229, %v1233
          %1236 = vst.msk [vmem:[#allocation4] sm:$0xff] %vm824, %v1235
          %v1237 = vld [vmem:[%s921] sm:$0xff]
          %v1238 = vrcp.pop %v1237
          %v1239 = vld [vmem:[#allocation4] sm:$0xff]
          %1241 = vset.pattern.permute.xlu0 0
          %1242 = vperm.xlu0 %1241, %v1238
          %v1243 = vpop.permute.xlu0 %1242
          %v1245 = vmul.f32 %v1239, %v1243
          %1246 = vst.msk [vmem:[#allocation4] sm:$0xff] %vm1018, %v1245
          %v1247 = vld [vmem:[%s1115] sm:$0xff]
          %v1248 = vrcp.pop %v1247
          %v1249 = vld [vmem:[#allocation4] sm:$0xff]
          %1251 = vset.pattern.permute.xlu0 0
          %1252 = vperm.xlu0 %1251, %v1248
          %v1253 = vpop.permute.xlu0 %1252
          %v1255 = vmul.f32 %v1249, %v1253
          %1256 = vst.msk [vmem:[#allocation4] sm:$0xff] %vm1212, %v1255
          %v1257 = vld [vmem:[#allocation4] sm:$0xff]
          %v1258 = vld [vmem:[#allocation13] sm:$0xff]
          %v1259 = vld [vmem:[#allocation13 + $0x8] sm:$0xff]
          %v1260 = vld [vmem:[#allocation13 + $0x10] sm:$0xff]
          %v1261 = vld [vmem:[#allocation13 + $0x18] sm:$0xff]
          %v1262 = vld [vmem:[%s5] sm:$0x1]
          %v1264 = vlaneseq
          %v1265 = vshrl.u32 %v1264, 7
          %v1266 = vsub.s32 0, %v1265
          %v1267 = vrot.slane %v1262, %v1266
          %vm1269 = vcmask 261120
          %v1271 = vsel %vm1269, %v1257, 0
          %1273 = vmatprep.subr.mxu0 0.0
          %1274 = vmatpush1.msra.mxu0 %v1258
          %1275 = vmatprep.subr.mxu0 0.0
          %1276 = vmatpush1.msra.mxu0 %v1259
          %1277 = vmatprep.subr.mxu0 0.0
          %1278 = vmatpush1.msra.mxu0 %v1260
          %1279 = vmatprep.subr.mxu0 0.0
          %1280 = vmatpush1.msra.mxu0 %v1261
          %1281 = vmatprep.subr.mxu0 0.0
          %1282 = vmatpush1.msra.mxu0 0.0
          %1283 = vmatprep.subr.mxu0 0.0
          %1284 = vmatpush1.msra.mxu0 0.0
          %1285 = vmatprep.subr.mxu0 0.0
          %1286 = vmatpush1.msra.mxu0 0.0
          %1287 = vmatprep.subr.mxu0 0.0
          %1288 = vmatpush1.msra.mxu0 0.0
          %1289 = vmatprep.subr.mxu0 0.0
          %1290 = vmatpush1.msra.mxu0 0.0
          %1291 = vmatprep.subr.mxu0 0.0
          %1292 = vmatpush1.msra.mxu0 0.0
          %1293 = vmatprep.subr.mxu0 0.0
          %1294 = vmatpush1.msra.mxu0 0.0
          %1295 = vmatprep.subr.mxu0 0.0
          %1296 = vmatpush1.msra.mxu0 0.0
          %1297 = vmatprep.subr.mxu0 0.0
          %1298 = vmatpush1.msra.mxu0 0.0
          %1299 = vmatprep.subr.mxu0 0.0
          %1300 = vmatpush1.msra.mxu0 0.0
          %1301 = vmatprep.subr.mxu0 0.0
          %1302 = vmatpush1.msra.mxu0 0.0
          %1303 = vmatprep.subr.mxu0 0.0
          %1304 = vmatpush1.msra.mxu0 0.0
          %1305 = vmatprep.subr.mxu0 0.0
          %1306 = vmatpush1.msra.mxu0 0.0
          %1307 = vmatprep.subr.mxu0 0.0
          %1308 = vmatpush1.msra.mxu0 0.0
          %1309 = vmatprep.subr.mxu0 0.0
          %1310 = vmatpush1.msra.mxu0 0.0
          %1311 = vmatprep.subr.mxu0 0.0
          %1312 = vmatpush1.msra.mxu0 0.0
          %1313 = vmatprep.subr.mxu0 0.0
          %1314 = vmatpush1.msra.mxu0 0.0
          %1315 = vmatprep.subr.mxu0 0.0
          %1316 = vmatpush1.msra.mxu0 0.0
          %1317 = vmatprep.subr.mxu0 0.0
          %1318 = vmatpush1.msra.mxu0 0.0
          %1319 = vmatprep.subr.mxu0 0.0
          %1320 = vmatpush1.msra.mxu0 0.0
          %1321 = vmatprep.subr.mxu0 0.0
          %1322 = vmatpush1.msra.mxu0 0.0
          %1323 = vmatprep.subr.mxu0 0.0
          %1324 = vmatpush1.msra.mxu0 0.0
          %1325 = vmatprep.subr.mxu0 0.0
          %1326 = vmatpush1.msra.mxu0 0.0
          %1327 = vmatprep.subr.mxu0 0.0
          %1328 = vmatpush1.msra.mxu0 0.0
          %1329 = vmatprep.subr.mxu0 0.0
          %1330 = vmatpush1.msra.mxu0 0.0
          %1331 = vmatprep.subr.mxu0 0.0
          %1332 = vmatpush1.msra.mxu0 0.0
          %1333 = vmatprep.subr.mxu0 0.0
          %1334 = vmatpush1.msra.mxu0 0.0
          %1335 = vmatprep.subr.mxu0 0.0
          %1336 = vmatpush1.msra.mxu0 0.0
          %1337 = vmatprep.mubr.f32.mxu0 0.0
          %1338 = vmatmul.mubr.f32.gmra.mrb[0].mxu0 %v1271
          %v1339 = vpop.f32.mrb[0].mxu0
          %v1340 = vadd.f32 %v1267, %v1339
          %v1341 = vpop.f32.mrb[0].mxu0
          %1342 = vdwg.mxu0
          %1343 = vst.msk [vmem:[%s424] sm:$0xff] %vm1269, %v1340
        $region72: #{tpu_custom_call.1} parent=43 // pred_fallthru
          _
        %s1344 = sand.u32 %s214, 1
        %s1345 = scalar_lea.sflag [#allocation7], %s1344
        %s1346 = sand.u32 %s214, 1
        %s1347 = smul.addr %s1346, 8
        %s1348 = scalar_lea.vmem [#allocation14], %s1347
        // Predicated region
        $region73: #{tpu_custom_call.1} parent=43 // pred_check
          %p1349 = pneg %p224
        $region74: #{tpu_custom_call.1} parent=43 // pred_check_branch
          %1351 = sbr.rel (%p1349) target = $region76
        $region75: #{tpu_custom_call.1} parent=43 // pred_region
          %s1353 = ssub.s32 128, 128
          %1354 = vsyncadd %s1345, %s1353
          %s1355 = sadd.s32 %s35, %s34
          %s1356 = smul.addr %s1355, 128
          %s1357 = scalar_lea.hbm %s6, %s1356
          %s1359 = sshll.u32 %s1348, 4
          %s1360 = int_to_ptr.vmem [resolvable:$true] %s1359
          %1362 = dma.vmem_to_hbm [thread:$0]  %s1360, 128, %s1357, %s1345
        $region76: #{tpu_custom_call.1} parent=43 // pred_fallthru
          _
      $region44: #{tpu_custom_call.1} parent=5 // pred_fallthru
        _
      %p1363 = scmp.le.s32.totalorder 2, %s24
      // Predicated region
      $region77: #{tpu_custom_call.1} parent=5 // pred_check
        %p1364 = pneg %p1363
      $region78: #{tpu_custom_call.1} parent=5 // pred_check_branch
        %1366 = sbr.rel (%p1364) target = $region80
      $region79: #{tpu_custom_call.1} parent=5 // pred_region
        %s1367 = ssub.s32 %s24, 2
        // Predicated region
        $region81: #{tpu_custom_call.1} parent=79 // pred_check
          %p1368 = pneg %p230
        $region82: #{tpu_custom_call.1} parent=79 // pred_check_branch
          %1370 = sbr.rel (%p1368) target = $region84
        $region83: #{tpu_custom_call.1} parent=79 // pred_region
          %s1371 = sand.u32 %s215, 1
          %s1372 = scalar_lea.sflag [#allocation7], %s1371
          %s1373 = sand.u32 %s215, 1
          %s1374 = smul.addr %s1373, 8
          %s1375 = scalar_lea.vmem [#allocation14], %s1374
          %1376 = dma.done %s1372, 128
        $region84: #{tpu_custom_call.1} parent=79 // pred_fallthru
          _
      $region80: #{tpu_custom_call.1} parent=5 // pred_fallthru
        _
    $region6: #{tpu_custom_call.1} parent=1 // loop_footer
      %s28 = sadd.s32 1, %s24
    $region7: #{tpu_custom_call.1} parent=1 // loop_footer_branch
      %23 = sbr.rel target = $region3
    $region8: #{tpu_custom_call.1} parent=1 // loop_exit
      _
    %1377 = vsyncpa [#allocation6], 1
    %s1378 = scalar_lea.sflag [#allocation6], 1
    %1379 = vsyncpa %s1378, 1
    %1380 = vsyncpa [#allocation9], 1
    %s1381 = scalar_lea.sflag [#allocation9], 1
    %1382 = vsyncpa %s1381, 1
    %1383 = vsyncpa [#allocation12], 1
    %s1384 = scalar_lea.sflag [#allocation12], 1
    %1385 = vsyncpa %s1384, 1
    %1386 = vsyncpa [#allocation7], 1
    %s1387 = scalar_lea.sflag [#allocation7], 1
    %1388 = vsyncpa %s1387, 1

</llo_original>
